<compile_context>
chip_gen: v5e
topology: v5e:2x2
jax: 0.10.0
libtpu: 0.0.40
codegen_flags: <defaults>
</compile_context>

<pallas_src>
import functools

import jax
import jax.numpy as jnp
import numpy as np
from jax import lax
from jax.experimental import pallas as pl
from jax.experimental.pallas import tpu as pltpu


def _fft_loss_kernel(x_ref, y_ref, ch_ref, sh_ref, cw_ref, sw_ref, mask_ref,
                     out_ref, acc_ref, *, tb, w, inv_denom):
    """One grid step: rfft2 of `tb` input/target images + L1 terms, accumulated.

    Grid = (core_split, step): axis 0 is "parallel" (megacore sharding), axis 1
    is the sequential reduction over this core's image blocks.
    """
    i = pl.program_id(1)

    @pl.when(i == 0)
    def _init():
        acc_ref[...] = jnp.zeros_like(acc_ref)

    f32 = jnp.float32
    xall = x_ref[...]            # (H, tb*W)  bf16, images side by side in lanes
    yall = y_ref[...]
    ch = ch_ref[...]             # (Hh, H)    bf16   cos(2*pi*k*m/H), k <= H//2
    sh = sh_ref[...]             # (Hh, H)    bf16  -sin(2*pi*k*m/H)
    cw = cw_ref[...]             # (W, Wout)  bf16   cos(2*pi*n*l/W)
    sw = sw_ref[...]             # (W, Wout)  bf16  -sin(2*pi*n*l/W)
    mirror_mask = mask_ref[...]  # (tb*Hh, 1) f32; 1 where the mirrored row H-k exists

    # ---- stage 1: half-spectrum row DFT along H (conjugate symmetry) --------
    # One lane-dense (Hh, H) @ (H, tb*W) matmul per product, shared by all images.
    def row_dft(a):
        re = jnp.dot(ch, a, preferred_element_type=f32)      # (Hh, tb*W)
        im = jnp.dot(sh, a, preferred_element_type=f32)
        return re, im

    xre, xim = row_dft(xall)
    yre, yim = row_dft(yall)

    # ---- stage 2: column rFFT along W ---------------------------------------
    # Stack every image's (Hh, W) slab into one tall (tb*Hh, W) operand so the
    # four column-DFT products are single large MXU matmuls (not tb tiny ones).
    def tall(z):
        pieces = [z[:, b * w:(b + 1) * w] for b in range(tb)]
        return jnp.concatenate(pieces, axis=0).astype(jnp.bfloat16)

    def col_products(re, im):
        re_t, im_t = tall(re), tall(im)
        p1 = jnp.dot(re_t, cw, preferred_element_type=f32)   # (tb*Hh, Wout)
        p2 = jnp.dot(im_t, sw, preferred_element_type=f32)
        p3 = jnp.dot(re_t, sw, preferred_element_type=f32)
        p4 = jnp.dot(im_t, cw, preferred_element_type=f32)
        return p1, p2, p3, p4

    xp1, xp2, xp3, xp4 = col_products(xre, xim)
    yp1, yp2, yp3, yp4 = col_products(yre, yim)

    # ---- elementwise L1 terms (rsqrt path: 2 rsqrt + 1 sqrt per element) -----
    def pair_loss(ar, ai, br, bi):
        sa = ar * ar + ai * ai
        sb = br * br + bi * bi
        inv_a = lax.rsqrt(sa)                    # 1/|a|  (zero bins -> inf, as in torch)
        inv_b = lax.rsqrt(sb)
        amp = jnp.abs(sa * inv_a - sb * inv_b)   # | |a| - |b| |
        dr = ar * inv_a - br * inv_b
        di = ai * inv_a - bi * inv_b
        return amp + jnp.sqrt(dr * dr + di * di)  # + | a/|a| - b/|b| |

    # rows k = 0..H//2         : X[k]   = (p1 - p2) + i (p3 + p4)
    # mirrored rows H-k (k>=1) : X[H-k] = (p1 + p2) + i (p3 - p4)
    top = pair_loss(xp1 - xp2, xp3 + xp4, yp1 - yp2, yp3 + yp4)
    bot = pair_loss(xp1 + xp2, xp3 - xp4, yp1 + yp2, yp3 - yp4)

    # Deferred reduction: pure VPU accumulation here, one scalar reduce at the end.
    acc_ref[...] += top + mirror_mask * bot

    @pl.when(i == pl.num_programs(1) - 1)
    def _finish():
        total = jnp.sum(acc_ref[...], keepdims=True) * inv_denom     # (1, 1)
        out_ref[...] = jnp.broadcast_to(total, out_ref.shape).astype(out_ref.dtype)


def _choose_tiling(n_images, w):
    """Pick (core_splits, images_per_step).

    images_per_step must divide the per-core image count and give a lane width
    (images_per_step * W) that is a multiple of 128 (or span the whole array).
    Lane width is capped at 512 so per-step VMEM stays modest on v7x / v5e.
    """
    for cs in (2, 1):
        if n_images % cs:
            continue
        per_core = n_images // cs
        divisors = [d for d in range(per_core, 0, -1) if per_core % d == 0]
        valid = [d for d in divisors
                 if (d * w) % 128 == 0 or (cs == 1 and d == n_images)]
        if not valid:
            continue
        capped = [d for d in valid if d * w <= 512]
        return cs, (capped[0] if capped else valid[-1])
    return 1, n_images


def fft_loss(inputs, targets):
    """Pallas TPU implementation of FFTLoss.forward(inputs, targets)."""
    B, C, H, W = inputs.shape
    N = B * C
    Hh = H // 2 + 1            # half spectrum along H (conjugate symmetry)
    Wout = W // 2 + 1          # rfft output size along W

    cs, tb = _choose_tiling(N, W)
    nb = N // (cs * tb)        # sequential steps per core
    lanes = tb * W

    # Images to the lane axis: (N, H, W) -> (H, N*W); bf16 halves the DMA bytes.
    def to_lane_major(a):
        a = a.reshape(N, H, W).astype(jnp.bfloat16)
        return jnp.transpose(a, (1, 0, 2)).reshape(H, N * W)

    x_t = to_lane_major(inputs)
    y_t = to_lane_major(targets)

    # Half-spectrum DFT matrices along H and rFFT matrices along W (bf16, MXU-native).
    k = np.arange(Hh)[:, None]
    m = np.arange(H)[None, :]
    ang_h = 2.0 * np.pi * (k * m) / H
    ch = jnp.asarray(np.cos(ang_h), dtype=jnp.bfloat16)
    sh = jnp.asarray(-np.sin(ang_h), dtype=jnp.bfloat16)

    n = np.arange(W)[:, None]
    l = np.arange(Wout)[None, :]
    ang_w = 2.0 * np.pi * (n * l) / W
    cw = jnp.asarray(np.cos(ang_w), dtype=jnp.bfloat16)
    sw = jnp.asarray(-np.sin(ang_w), dtype=jnp.bfloat16)

    # Mirror-row weights (image-major rows, k = row index within an image block):
    # rows H-k exist only for 1 <= k <= H - Hh, so k = 0 (DC) and k = H/2
    # (Nyquist, even H) are never counted twice -> denominator stays N*H*Wout.
    krow = np.tile(np.arange(Hh), tb)
    mirror = ((krow >= 1) & (krow <= H - Hh)).astype(np.float32)[:, None]
    mirror = jnp.asarray(mirror)                       # (tb*Hh, 1)

    inv_denom = 1.0 / float(N * H * Wout)              # mean over all rfft2 bins
    kernel = functools.partial(_fft_loss_kernel, tb=tb, w=W, inv_denom=inv_denom)

    # Rough per-step VMEM estimate; raise the scoped limit only when necessary
    # (v5e default 16 MiB), keeping it <= 64 MiB for v7x.
    vmem_est = (2 * 2 * H * lanes * 2                  # x/y blocks, double buffered, bf16
                + 2 * 2 * (Hh * H + W * Wout) * 2      # DFT matrices, double buffered
                + 16 * Hh * lanes * 4                  # f32 stage-1/2 intermediates
                + tb * Hh * max(Wout, 128) * 4)        # accumulator scratch
    cp = dict(dimension_semantics=("parallel", "arbitrary"))
    if vmem_est > (16 << 20):
        cp["vmem_limit_bytes"] = int(min(vmem_est + (8 << 20), 64 << 20))

    out = pl.pallas_call(
        kernel,
        out_shape=jax.ShapeDtypeStruct((cs * 8, 128), jnp.float32),
        grid_spec=pltpu.PrefetchScalarGridSpec(
            num_scalar_prefetch=0,
            grid=(cs, nb),
            in_specs=[
                pl.BlockSpec((H, lanes), lambda c, i: (0, c * nb + i)),   # inputs block
                pl.BlockSpec((H, lanes), lambda c, i: (0, c * nb + i)),   # targets block
                pl.BlockSpec((Hh, H), lambda c, i: (0, 0)),               # cos, row DFT
                pl.BlockSpec((Hh, H), lambda c, i: (0, 0)),               # -sin, row DFT
                pl.BlockSpec((W, Wout), lambda c, i: (0, 0)),             # cos, col rFFT
                pl.BlockSpec((W, Wout), lambda c, i: (0, 0)),             # -sin, col rFFT
                pl.BlockSpec((tb * Hh, 1), lambda c, i: (0, 0)),          # mirror-row mask
            ],
            out_specs=pl.BlockSpec((8, 128), lambda c, i: (c, 0)),        # per-core partial
            scratch_shapes=[pltpu.VMEM((tb * Hh, Wout), jnp.float32)],
        ),
        compiler_params=pltpu.CompilerParams(**cp),
    )(x_t, y_t, ch, sh, cw, sw, mirror)

    # One (already mean-normalized) partial per core split; combine in JAX.
    return jnp.sum(out[0::8, 0])


if __name__ == "__main__":
    key = jax.random.PRNGKey(0)
    k1, k2 = jax.random.split(key)
    shape = (2, 4, 16, 32)     # (batch, channels, H, W)
    inputs = jax.random.normal(k1, shape, dtype=jnp.float32)
    targets = jax.random.normal(k2, shape, dtype=jnp.float32)

    loss = jax.block_until_ready(fft_loss(inputs, targets))

    # Plain-JAX reference of the PyTorch semantics (rfft2 + complex L1).
    xf = jnp.fft.rfft2(inputs)
    yf = jnp.fft.rfft2(targets)
    amp_ref = jnp.mean(jnp.abs(jnp.abs(xf) - jnp.abs(yf)))
    phase_ref = jnp.mean(jnp.abs(xf / jnp.abs(xf) - yf / jnp.abs(yf)))
    ref = amp_ref + phase_ref

    assert np.allclose(np.asarray(loss), np.asarray(ref), rtol=2e-2, atol=2e-2), (
        float(loss), float(ref))
    print("KERNEL_OK")
</pallas_src>

<mosaic_0001>
module attributes {stable_mosaic.version = 11 : i64} {
  func.func @_fft_loss_kernel(%arg0: i32, %arg1: i32, %arg2: memref<16x128xbf16, #tpu.memory_space<vmem>>, %arg3: memref<16x128xbf16, #tpu.memory_space<vmem>>, %arg4: memref<9x16xbf16, #tpu.memory_space<vmem>>, %arg5: memref<9x16xbf16, #tpu.memory_space<vmem>>, %arg6: memref<32x17xbf16, #tpu.memory_space<vmem>>, %arg7: memref<32x17xbf16, #tpu.memory_space<vmem>>, %arg8: memref<36x1xf32, #tpu.memory_space<vmem>>, %arg9: memref<8x128xf32, #tpu.memory_space<vmem>>, %arg10: memref<36x17xf32, #tpu.memory_space<vmem>>) attributes {dimension_semantics = [#tpu.dimension_semantics<parallel>, #tpu.dimension_semantics<arbitrary>], iteration_bounds = array<i64: 2, 1>, scalar_prefetch = 0 : i64, scratch_operands = 1 : i64, tpu.core_type = #tpu.core_type<tc>, window_params = [{transform_indices = @transform_0, window_bounds = array<i64: 16, 128>}, {transform_indices = @transform_1, window_bounds = array<i64: 16, 128>}, {pipeline_mode = #tpu.pipeline_mode<synchronous>, transform_indices = @transform_2, window_bounds = array<i64: 9, 16>}, {pipeline_mode = #tpu.pipeline_mode<synchronous>, transform_indices = @transform_3, window_bounds = array<i64: 9, 16>}, {pipeline_mode = #tpu.pipeline_mode<synchronous>, transform_indices = @transform_4, window_bounds = array<i64: 32, 17>}, {pipeline_mode = #tpu.pipeline_mode<synchronous>, transform_indices = @transform_5, window_bounds = array<i64: 32, 17>}, {pipeline_mode = #tpu.pipeline_mode<synchronous>, transform_indices = @transform_6, window_bounds = array<i64: 36, 1>}, {transform_indices = @transform_7, window_bounds = array<i64: 8, 128>}]} {
    %c0_i32 = arith.constant 0 : i32
    %0 = arith.cmpi eq, %arg1, %c0_i32 : i32
    %1 = arith.extui %0 : i1 to i32
    %c0_i32_0 = arith.constant 0 : i32
    %2 = arith.cmpi ne, %1, %c0_i32_0 : i32
    scf.if %2 {
      %cst_31 = arith.constant 0.000000e+00 : f32
      %109 = vector.broadcast %cst_31 : f32 to vector<36x17xf32>
      %c0_32 = arith.constant 0 : index
      %c0_33 = arith.constant 0 : index
      %110 = vector.load %arg10[%c0_32, %c0_33] : memref<36x17xf32, #tpu.memory_space<vmem>>, vector<36x17xf32>
      tpu.vector_store %arg10[%c0_32, %c0_33], %109 {strides = array<i32>} : memref<36x17xf32, #tpu.memory_space<vmem>>, vector<36x17xf32>,
    } else {
    }
    %c0 = arith.constant 0 : index
    %c0_1 = arith.constant 0 : index
    %3 = vector.load %arg2[%c0, %c0_1] : memref<16x128xbf16, #tpu.memory_space<vmem>>, vector<16x128xbf16>
    %c0_2 = arith.constant 0 : index
    %c0_3 = arith.constant 0 : index
    %4 = vector.load %arg3[%c0_2, %c0_3] : memref<16x128xbf16, #tpu.memory_space<vmem>>, vector<16x128xbf16>
    %c0_4 = arith.constant 0 : index
    %c0_5 = arith.constant 0 : index
    %5 = vector.load %arg4[%c0_4, %c0_5] : memref<9x16xbf16, #tpu.memory_space<vmem>>, vector<9x16xbf16>
    %c0_6 = arith.constant 0 : index
    %c0_7 = arith.constant 0 : index
    %6 = vector.load %arg5[%c0_6, %c0_7] : memref<9x16xbf16, #tpu.memory_space<vmem>>, vector<9x16xbf16>
    %c0_8 = arith.constant 0 : index
    %c0_9 = arith.constant 0 : index
    %7 = vector.load %arg6[%c0_8, %c0_9] : memref<32x17xbf16, #tpu.memory_space<vmem>>, vector<32x17xbf16>
    %c0_10 = arith.constant 0 : index
    %c0_11 = arith.constant 0 : index
    %8 = vector.load %arg7[%c0_10, %c0_11] : memref<32x17xbf16, #tpu.memory_space<vmem>>, vector<32x17xbf16>
    %c0_12 = arith.constant 0 : index
    %c0_13 = arith.constant 0 : index
    %9 = vector.load %arg8[%c0_12, %c0_13] : memref<36x1xf32, #tpu.memory_space<vmem>>, vector<36x1xf32>
    %cst = arith.constant dense<0.000000e+00> : vector<9x128xf32>
    %10 = tpu.matmul %5, %3, %cst {dimension_numbers = #tpu.dot_dimension_numbers<[1], [0], [0], [1], [0, 0, 1, 1], [], []>} : vector<9x16xbf16>, vector<16x128xbf16>, vector<9x128xf32> -> vector<9x128xf32>
    %cst_14 = arith.constant dense<0.000000e+00> : vector<9x128xf32>
    %11 = tpu.matmul %6, %3, %cst_14 {dimension_numbers = #tpu.dot_dimension_numbers<[1], [0], [0], [1], [0, 0, 1, 1], [], []>} : vector<9x16xbf16>, vector<16x128xbf16>, vector<9x128xf32> -> vector<9x128xf32>
    %cst_15 = arith.constant dense<0.000000e+00> : vector<9x128xf32>
    %12 = tpu.matmul %5, %4, %cst_15 {dimension_numbers = #tpu.dot_dimension_numbers<[1], [0], [0], [1], [0, 0, 1, 1], [], []>} : vector<9x16xbf16>, vector<16x128xbf16>, vector<9x128xf32> -> vector<9x128xf32>
    %cst_16 = arith.constant dense<0.000000e+00> : vector<9x128xf32>
    %13 = tpu.matmul %6, %4, %cst_16 {dimension_numbers = #tpu.dot_dimension_numbers<[1], [0], [0], [1], [0, 0, 1, 1], [], []>} : vector<9x16xbf16>, vector<16x128xbf16>, vector<9x128xf32> -> vector<9x128xf32>
    %14 = vector.extract_strided_slice %10 {offsets = [0, 0], sizes = [9, 32], strides = [1, 1]} : vector<9x128xf32> to vector<9x32xf32>
    %15 = vector.extract_strided_slice %10 {offsets = [0, 32], sizes = [9, 32], strides = [1, 1]} : vector<9x128xf32> to vector<9x32xf32>
    %16 = vector.extract_strided_slice %10 {offsets = [0, 64], sizes = [9, 32], strides = [1, 1]} : vector<9x128xf32> to vector<9x32xf32>
    %17 = vector.extract_strided_slice %10 {offsets = [0, 96], sizes = [9, 32], strides = [1, 1]} : vector<9x128xf32> to vector<9x32xf32>
    %18 = tpu.concatenate %14, %15, %16, %17 in 0 : vector<9x32xf32>, vector<9x32xf32>, vector<9x32xf32>, vector<9x32xf32> -> vector<36x32xf32>
    %19 = arith.truncf %18 : vector<36x32xf32> to vector<36x32xbf16>
    %20 = vector.extract_strided_slice %11 {offsets = [0, 0], sizes = [9, 32], strides = [1, 1]} : vector<9x128xf32> to vector<9x32xf32>
    %21 = vector.extract_strided_slice %11 {offsets = [0, 32], sizes = [9, 32], strides = [1, 1]} : vector<9x128xf32> to vector<9x32xf32>
    %22 = vector.extract_strided_slice %11 {offsets = [0, 64], sizes = [9, 32], strides = [1, 1]} : vector<9x128xf32> to vector<9x32xf32>
    %23 = vector.extract_strided_slice %11 {offsets = [0, 96], sizes = [9, 32], strides = [1, 1]} : vector<9x128xf32> to vector<9x32xf32>
    %24 = tpu.concatenate %20, %21, %22, %23 in 0 : vector<9x32xf32>, vector<9x32xf32>, vector<9x32xf32>, vector<9x32xf32> -> vector<36x32xf32>
    %25 = arith.truncf %24 : vector<36x32xf32> to vector<36x32xbf16>
    %cst_17 = arith.constant dense<0.000000e+00> : vector<36x17xf32>
    %26 = tpu.matmul %19, %7, %cst_17 {dimension_numbers = #tpu.dot_dimension_numbers<[1], [0], [0], [1], [0, 0, 1, 1], [], []>} : vector<36x32xbf16>, vector<32x17xbf16>, vector<36x17xf32> -> vector<36x17xf32>
    %cst_18 = arith.constant dense<0.000000e+00> : vector<36x17xf32>
    %27 = tpu.matmul %25, %8, %cst_18 {dimension_numbers = #tpu.dot_dimension_numbers<[1], [0], [0], [1], [0, 0, 1, 1], [], []>} : vector<36x32xbf16>, vector<32x17xbf16>, vector<36x17xf32> -> vector<36x17xf32>
    %cst_19 = arith.constant dense<0.000000e+00> : vector<36x17xf32>
    %28 = tpu.matmul %19, %8, %cst_19 {dimension_numbers = #tpu.dot_dimension_numbers<[1], [0], [0], [1], [0, 0, 1, 1], [], []>} : vector<36x32xbf16>, vector<32x17xbf16>, vector<36x17xf32> -> vector<36x17xf32>
    %cst_20 = arith.constant dense<0.000000e+00> : vector<36x17xf32>
    %29 = tpu.matmul %25, %7, %cst_20 {dimension_numbers = #tpu.dot_dimension_numbers<[1], [0], [0], [1], [0, 0, 1, 1], [], []>} : vector<36x32xbf16>, vector<32x17xbf16>, vector<36x17xf32> -> vector<36x17xf32>
    %30 = vector.extract_strided_slice %12 {offsets = [0, 0], sizes = [9, 32], strides = [1, 1]} : vector<9x128xf32> to vector<9x32xf32>
    %31 = vector.extract_strided_slice %12 {offsets = [0, 32], sizes = [9, 32], strides = [1, 1]} : vector<9x128xf32> to vector<9x32xf32>
    %32 = vector.extract_strided_slice %12 {offsets = [0, 64], sizes = [9, 32], strides = [1, 1]} : vector<9x128xf32> to vector<9x32xf32>
    %33 = vector.extract_strided_slice %12 {offsets = [0, 96], sizes = [9, 32], strides = [1, 1]} : vector<9x128xf32> to vector<9x32xf32>
    %34 = tpu.concatenate %30, %31, %32, %33 in 0 : vector<9x32xf32>, vector<9x32xf32>, vector<9x32xf32>, vector<9x32xf32> -> vector<36x32xf32>
    %35 = arith.truncf %34 : vector<36x32xf32> to vector<36x32xbf16>
    %36 = vector.extract_strided_slice %13 {offsets = [0, 0], sizes = [9, 32], strides = [1, 1]} : vector<9x128xf32> to vector<9x32xf32>
    %37 = vector.extract_strided_slice %13 {offsets = [0, 32], sizes = [9, 32], strides = [1, 1]} : vector<9x128xf32> to vector<9x32xf32>
    %38 = vector.extract_strided_slice %13 {offsets = [0, 64], sizes = [9, 32], strides = [1, 1]} : vector<9x128xf32> to vector<9x32xf32>
    %39 = vector.extract_strided_slice %13 {offsets = [0, 96], sizes = [9, 32], strides = [1, 1]} : vector<9x128xf32> to vector<9x32xf32>
    %40 = tpu.concatenate %36, %37, %38, %39 in 0 : vector<9x32xf32>, vector<9x32xf32>, vector<9x32xf32>, vector<9x32xf32> -> vector<36x32xf32>
    %41 = arith.truncf %40 : vector<36x32xf32> to vector<36x32xbf16>
    %cst_21 = arith.constant dense<0.000000e+00> : vector<36x17xf32>
    %42 = tpu.matmul %35, %7, %cst_21 {dimension_numbers = #tpu.dot_dimension_numbers<[1], [0], [0], [1], [0, 0, 1, 1], [], []>} : vector<36x32xbf16>, vector<32x17xbf16>, vector<36x17xf32> -> vector<36x17xf32>
    %cst_22 = arith.constant dense<0.000000e+00> : vector<36x17xf32>
    %43 = tpu.matmul %41, %8, %cst_22 {dimension_numbers = #tpu.dot_dimension_numbers<[1], [0], [0], [1], [0, 0, 1, 1], [], []>} : vector<36x32xbf16>, vector<32x17xbf16>, vector<36x17xf32> -> vector<36x17xf32>
    %cst_23 = arith.constant dense<0.000000e+00> : vector<36x17xf32>
    %44 = tpu.matmul %35, %8, %cst_23 {dimension_numbers = #tpu.dot_dimension_numbers<[1], [0], [0], [1], [0, 0, 1, 1], [], []>} : vector<36x32xbf16>, vector<32x17xbf16>, vector<36x17xf32> -> vector<36x17xf32>
    %cst_24 = arith.constant dense<0.000000e+00> : vector<36x17xf32>
    %45 = tpu.matmul %41, %7, %cst_24 {dimension_numbers = #tpu.dot_dimension_numbers<[1], [0], [0], [1], [0, 0, 1, 1], [], []>} : vector<36x32xbf16>, vector<32x17xbf16>, vector<36x17xf32> -> vector<36x17xf32>
    %46 = arith.subf %26, %27 : vector<36x17xf32>
    %47 = arith.addf %28, %29 : vector<36x17xf32>
    %48 = arith.subf %42, %43 : vector<36x17xf32>
    %49 = arith.addf %44, %45 : vector<36x17xf32>
    %50 = arith.mulf %46, %46 : vector<36x17xf32>
    %51 = arith.mulf %47, %47 : vector<36x17xf32>
    %52 = arith.addf %50, %51 : vector<36x17xf32>
    %53 = arith.mulf %48, %48 : vector<36x17xf32>
    %54 = arith.mulf %49, %49 : vector<36x17xf32>
    %55 = arith.addf %53, %54 : vector<36x17xf32>
    %56 = math.rsqrt %52 : vector<36x17xf32>
    %57 = math.rsqrt %55 : vector<36x17xf32>
    %58 = arith.mulf %52, %56 : vector<36x17xf32>
    %59 = arith.mulf %55, %57 : vector<36x17xf32>
    %60 = arith.subf %58, %59 : vector<36x17xf32>
    %61 = math.absf %60 : vector<36x17xf32>
    %62 = arith.mulf %46, %56 : vector<36x17xf32>
    %63 = arith.mulf %48, %57 : vector<36x17xf32>
    %64 = arith.subf %62, %63 : vector<36x17xf32>
    %65 = arith.mulf %47, %56 : vector<36x17xf32>
    %66 = arith.mulf %49, %57 : vector<36x17xf32>
    %67 = arith.subf %65, %66 : vector<36x17xf32>
    %68 = arith.mulf %64, %64 : vector<36x17xf32>
    %69 = arith.mulf %67, %67 : vector<36x17xf32>
    %70 = arith.addf %68, %69 : vector<36x17xf32>
    %71 = math.sqrt %70 : vector<36x17xf32>
    %72 = arith.addf %61, %71 : vector<36x17xf32>
    %73 = arith.addf %26, %27 : vector<36x17xf32>
    %74 = arith.subf %28, %29 : vector<36x17xf32>
    %75 = arith.addf %42, %43 : vector<36x17xf32>
    %76 = arith.subf %44, %45 : vector<36x17xf32>
    %77 = arith.mulf %73, %73 : vector<36x17xf32>
    %78 = arith.mulf %74, %74 : vector<36x17xf32>
    %79 = arith.addf %77, %78 : vector<36x17xf32>
    %80 = arith.mulf %75, %75 : vector<36x17xf32>
    %81 = arith.mulf %76, %76 : vector<36x17xf32>
    %82 = arith.addf %80, %81 : vector<36x17xf32>
    %83 = math.rsqrt %79 : vector<36x17xf32>
    %84 = math.rsqrt %82 : vector<36x17xf32>
    %85 = arith.mulf %79, %83 : vector<36x17xf32>
    %86 = arith.mulf %82, %84 : vector<36x17xf32>
    %87 = arith.subf %85, %86 : vector<36x17xf32>
    %88 = math.absf %87 : vector<36x17xf32>
    %89 = arith.mulf %73, %83 : vector<36x17xf32>
    %90 = arith.mulf %75, %84 : vector<36x17xf32>
    %91 = arith.subf %89, %90 : vector<36x17xf32>
    %92 = arith.mulf %74, %83 : vector<36x17xf32>
    %93 = arith.mulf %76, %84 : vector<36x17xf32>
    %94 = arith.subf %92, %93 : vector<36x17xf32>
    %95 = arith.mulf %91, %91 : vector<36x17xf32>
    %96 = arith.mulf %94, %94 : vector<36x17xf32>
    %97 = arith.addf %95, %96 : vector<36x17xf32>
    %98 = math.sqrt %97 : vector<36x17xf32>
    %99 = arith.addf %88, %98 : vector<36x17xf32>
    %c0_25 = arith.constant 0 : index
    %c0_26 = arith.constant 0 : index
    %100 = vector.load %arg10[%c0_25, %c0_26] : memref<36x17xf32, #tpu.memory_space<vmem>>, vector<36x17xf32>
    %101 = vector.broadcast %9 : vector<36x1xf32> to vector<36x17xf32>
    %102 = arith.mulf %101, %99 : vector<36x17xf32>
    %103 = arith.addf %72, %102 : vector<36x17xf32>
    %104 = arith.addf %100, %103 : vector<36x17xf32>
    %c0_27 = arith.constant 0 : index
    %c0_28 = arith.constant 0 : index
    %105 = vector.load %arg10[%c0_27, %c0_28] : memref<36x17xf32, #tpu.memory_space<vmem>>, vector<36x17xf32>
    tpu.vector_store %arg10[%c0_27, %c0_28], %104 {strides = array<i32>} : memref<36x17xf32, #tpu.memory_space<vmem>>, vector<36x17xf32>,
    %c0_i32_29 = arith.constant 0 : i32
    %106 = arith.cmpi eq, %arg1, %c0_i32_29 : i32
    %107 = arith.extui %106 : i1 to i32
    %c0_i32_30 = arith.constant 0 : i32
    %108 = arith.cmpi ne, %107, %c0_i32_30 : i32
    scf.if %108 {
      %c0_31 = arith.constant 0 : index
      %c0_32 = arith.constant 0 : index
      %109 = vector.load %arg10[%c0_31, %c0_32] : memref<36x17xf32, #tpu.memory_space<vmem>>, vector<36x17xf32>
      %110 = vector.shape_cast %109 : vector<36x17xf32> to vector<1x36x17xf32>
      %cst_33 = arith.constant dense<0.000000e+00> : vector<1xf32>
      %111 = vector.multi_reduction <add>, %110, %cst_33 [1, 2] : vector<1x36x17xf32> to vector<1xf32>
      %112 = vector.shape_cast %111 : vector<1xf32> to vector<1x1x1xf32>
      %113 = vector.extract %112[0, 0, 0] : f32 from vector<1x1x1xf32>
      %114 = vector.broadcast %113 : f32 to vector<1x1xf32>
      %cst_34 = arith.constant 4.59558825E-4 : f32
      %115 = vector.broadcast %cst_34 : f32 to vector<1x1xf32>
      %116 = arith.mulf %114, %115 : vector<1x1xf32>
      %117 = vector.shape_cast %116 : vector<1x1xf32> to vector<1x1xf32>
      %118 = vector.broadcast %117 : vector<1x1xf32> to vector<8x128xf32>
      %c0_35 = arith.constant 0 : index
      %c0_36 = arith.constant 0 : index
      %119 = vector.load %arg9[%c0_35, %c0_36] : memref<8x128xf32, #tpu.memory_space<vmem>>, vector<8x128xf32>
      tpu.vector_store %arg9[%c0_35, %c0_36], %118 {strides = array<i32>} : memref<8x128xf32, #tpu.memory_space<vmem>>, vector<8x128xf32>,
    } else {
    }
    return
  }
  func.func @transform_0(%arg0: i32, %arg1: i32) -> (i32, i32) {
    %c1_i32 = arith.constant 1 : i32
    %0 = arith.muli %arg0, %c1_i32 : i32
    %1 = arith.addi %0, %arg1 : i32
    %c0_i32 = arith.constant 0 : i32
    %c0_i32_0 = arith.constant 0 : i32
    return %c0_i32, %1 : i32, i32
  }
  func.func @transform_1(%arg0: i32, %arg1: i32) -> (i32, i32) {
    %c1_i32 = arith.constant 1 : i32
    %0 = arith.muli %arg0, %c1_i32 : i32
    %1 = arith.addi %0, %arg1 : i32
    %c0_i32 = arith.constant 0 : i32
    %c0_i32_0 = arith.constant 0 : i32
    return %c0_i32, %1 : i32, i32
  }
  func.func @transform_2(%arg0: i32, %arg1: i32) -> (i32, i32) {
    %c0_i32 = arith.constant 0 : i32
    %c0_i32_0 = arith.constant 0 : i32
    %c0_i32_1 = arith.constant 0 : i32
    return %c0_i32, %c0_i32_0 : i32, i32
  }
  func.func @transform_3(%arg0: i32, %arg1: i32) -> (i32, i32) {
    %c0_i32 = arith.constant 0 : i32
    %c0_i32_0 = arith.constant 0 : i32
    %c0_i32_1 = arith.constant 0 : i32
    return %c0_i32, %c0_i32_0 : i32, i32
  }
  func.func @transform_4(%arg0: i32, %arg1: i32) -> (i32, i32) {
    %c0_i32 = arith.constant 0 : i32
    %c0_i32_0 = arith.constant 0 : i32
    %c0_i32_1 = arith.constant 0 : i32
    return %c0_i32, %c0_i32_0 : i32, i32
  }
  func.func @transform_5(%arg0: i32, %arg1: i32) -> (i32, i32) {
    %c0_i32 = arith.constant 0 : i32
    %c0_i32_0 = arith.constant 0 : i32
    %c0_i32_1 = arith.constant 0 : i32
    return %c0_i32, %c0_i32_0 : i32, i32
  }
  func.func @transform_6(%arg0: i32, %arg1: i32) -> (i32, i32) {
    %c0_i32 = arith.constant 0 : i32
    %c0_i32_0 = arith.constant 0 : i32
    %c0_i32_1 = arith.constant 0 : i32
    return %c0_i32, %c0_i32_0 : i32, i32
  }
  func.func @transform_7(%arg0: i32, %arg1: i32) -> (i32, i32) {
    %c0_i32 = arith.constant 0 : i32
    %c0_i32_0 = arith.constant 0 : i32
    return %arg0, %c0_i32 : i32, i32
  }
}

</mosaic_0001>

<llo_original>
// kernel: tpu_custom_call.1
$region0: #{tpu_custom_call.1}
  #allocation0 [shape = 'u32[]', space=smem, size = 0x4, offset = 0x4, fixed_abs, tag = 'smem constant byte address 0x4 - core index']
  #allocation1 [shape = 'u32[72,128]{1,0:T(1,128)}', space=vmem, size = 0x9000, scoped, tag = 'internal scratch']
  #allocation2 [shape = 'f32[36,17]{1,0:T(8,128)}', space=vmem, size = 0x5000, scoped, tag = 'scratch operand']
  %s0 = inlined_call_operand.vmem [shape: bf16[16,256], index: 0, kind: input, shape index: {}]
  %s1 = inlined_call_operand.vmem [shape: bf16[16,256], index: 1, kind: input, shape index: {}]
  %s2 = inlined_call_operand.vmem [shape: bf16[9,16], index: 2, kind: input, shape index: {}]
  %s3 = inlined_call_operand.vmem [shape: bf16[9,16], index: 3, kind: input, shape index: {}]
  %s4 = inlined_call_operand.vmem [shape: bf16[32,17], index: 4, kind: input, shape index: {}]
  %s5 = inlined_call_operand.vmem [shape: bf16[32,17], index: 5, kind: input, shape index: {}]
  %s6 = inlined_call_operand.vmem [shape: f32[36,1], index: 6, kind: input, shape index: {}]
  %s7 = inlined_call_operand.hbm [shape: f32[16,128], index: 7, kind: output, shape index: {}]
  %s8 = sld [smem:[#allocation0]]
  $region151: #{tpu_custom_call.1} parent=0
    _
  %s10 = ssub.s32 1, %s8
  %s11 = scalar_select 0, %s10, %s8
  $region1: #{tpu_custom_call.1} parent=0
    #allocation3 [shape = 'u8[8192]{0}', space=vmem, size = 0x2000, scoped, tag = 'input window, operand 0']
    #allocation4 [shape = 'u8[8192]{0}', space=vmem, size = 0x2000, scoped, tag = 'input window, operand 1']
    #allocation5 [shape = 'u8[8192]{0}', space=vmem, size = 0x2000, scoped, tag = 'output window, operand 0']
    #allocation6 [shape = 's32[2]{0}', space=sflag, size = 0x8, scoped, tag = 'scoped memory for tpu_custom_call.1']
    %12 = vsyncpa [#allocation6], 0
    %s13 = scalar_lea.sflag [#allocation6], 1
    %14 = vsyncpa %s13, 0
    loop: start=0, step=1, limit=4
    $region2: #{tpu_custom_call.1} parent=1 // loop_pre_header
      _
    $region3: #{tpu_custom_call.1} parent=1 // loop_header
      %s16 = sphi 0, %s20
      %p17 = scmp.ge.s32.totalorder %s16, 4
      %s23 = sphi 0, %s35
      %s24 = sphi 0, %s31
      %s25 = sphi 0, %s23
      %s26 = sphi 0, %s24
      %s27 = sphi 0, %s25
      %s28 = sphi 0, %s26
      %s40 = sphi 0, %s42
      %s43 = sphi 0, %s40
      %s44 = sphi 0, %s43
      %s60 = sphi 0, %s44
      %s68 = sphi 0, %s70
      %s71 = sphi 0, %s68
      %s72 = sphi 0, %s71
      %s88 = sphi 0, %s72
      %s92 = sphi 0, %s92
      %s94 = sphi 0, %s92
      %s95 = sphi 0, %s94
      %s109 = sphi 0, %s95
      %s113 = sphi 0, %s113
      %s115 = sphi 0, %s113
      %s116 = sphi 0, %s115
      %s130 = sphi 0, %s116
      %s134 = sphi 0, %s134
      %s136 = sphi 0, %s134
      %s137 = sphi 0, %s136
      %s151 = sphi 0, %s137
      %s155 = sphi 0, %s155
      %s157 = sphi 0, %s155
      %s158 = sphi 0, %s157
      %s172 = sphi 0, %s158
      %s176 = sphi 0, %s176
      %s178 = sphi 0, %s176
      %s179 = sphi 0, %s178
      %s193 = sphi 0, %s179
      %s199 = sphi 0, %s201
      %s202 = sphi 0, %s199
      %s203 = sphi 0, %s202
      %s219 = sphi 0, %s203
    $region4: #{tpu_custom_call.1} parent=1 // loop_header_branch
      %19 = sbr.rel (%p17) target = $region8
    $region5: #{tpu_custom_call.1} parent=1 // loop_body
      %s21 = ssub.s32 %s16, 1
      %s22 = ssub.s32 %s16, 2
      %s29 = sadd.s32 1, %s24
      %p30 = scmp.ge.s32.totalorder %s29, 1
      %s31 = scalar_select %p30, 0, %s29
      %s32 = sadd.s32 1, %s23
      %s33 = scalar_select %p30, %s32, %s23
      %p34 = scmp.ge.s32.totalorder %s33, 2
      %s35 = scalar_select %p34, 0, %s33
      %s36 = sadd.s32 %s23, %s24
      %s37 = sadd.s32 %s35, %s31
      %s38 = ssub.s32 %s36, %s37
      %p39 = scmp.eq.s32.totalorder %s38, 0
      %s41 = sadd.s32 %s40, 1
      %s42 = scalar_select %p39, %s40, %s41
      %p45 = pneg %p39
      %p46 = scmp.eq.s32.totalorder %s16, 1
      %p47 = por %p45, %p46
      %p48 = scmp.ne.s32.totalorder %s40, %s43
      %p49 = scmp.eq.s32.totalorder %s16, 0
      %p50 = por %p48, %p49
      %p51 = scmp.ne.s32.totalorder %s40, %s43
      %p52 = scmp.eq.s32.totalorder %s21, 1
      %p53 = por %p51, %p52
      %p54 = scmp.ne.s32.totalorder %s43, %s44
      %p55 = scmp.eq.s32.totalorder %s21, 0
      %p56 = por %p54, %p55
      %p57 = scmp.ne.s32.totalorder %s43, %s44
      %p58 = scmp.eq.s32.totalorder %s22, 1
      %p59 = por %p57, %p58
      %p61 = scmp.ne.s32.totalorder %s44, %s60
      %p62 = scmp.eq.s32.totalorder %s22, 0
      %p63 = por %p61, %p62
      %s64 = sadd.s32 %s23, %s24
      %s65 = sadd.s32 %s35, %s31
      %s66 = ssub.s32 %s64, %s65
      %p67 = scmp.eq.s32.totalorder %s66, 0
      %s69 = sadd.s32 %s68, 1
      %s70 = scalar_select %p67, %s68, %s69
      %p73 = pneg %p67
      %p74 = scmp.eq.s32.totalorder %s16, 1
      %p75 = por %p73, %p74
      %p76 = scmp.ne.s32.totalorder %s68, %s71
      %p77 = scmp.eq.s32.totalorder %s16, 0
      %p78 = por %p76, %p77
      %p79 = scmp.ne.s32.totalorder %s68, %s71
      %p80 = scmp.eq.s32.totalorder %s21, 1
      %p81 = por %p79, %p80
      %p82 = scmp.ne.s32.totalorder %s71, %s72
      %p83 = scmp.eq.s32.totalorder %s21, 0
      %p84 = por %p82, %p83
      %p85 = scmp.ne.s32.totalorder %s71, %s72
      %p86 = scmp.eq.s32.totalorder %s22, 1
      %p87 = por %p85, %p86
      %p89 = scmp.ne.s32.totalorder %s72, %s88
      %p90 = scmp.eq.s32.totalorder %s22, 0
      %p91 = por %p89, %p90
      %s93 = sadd.s32 %s92, 1
      %p96 = scmp.eq.s32.totalorder %s16, 1
      %p97 = scmp.ne.s32.totalorder %s92, %s94
      %p98 = scmp.eq.s32.totalorder %s16, 0
      %p99 = por %p97, %p98
      %p100 = scmp.ne.s32.totalorder %s92, %s94
      %p101 = scmp.eq.s32.totalorder %s21, 1
      %p102 = por %p100, %p101
      %p103 = scmp.ne.s32.totalorder %s94, %s95
      %p104 = scmp.eq.s32.totalorder %s21, 0
      %p105 = por %p103, %p104
      %p106 = scmp.ne.s32.totalorder %s94, %s95
      %p107 = scmp.eq.s32.totalorder %s22, 1
      %p108 = por %p106, %p107
      %p110 = scmp.ne.s32.totalorder %s95, %s109
      %p111 = scmp.eq.s32.totalorder %s22, 0
      %p112 = por %p110, %p111
      %s114 = sadd.s32 %s113, 1
      %p117 = scmp.eq.s32.totalorder %s16, 1
      %p118 = scmp.ne.s32.totalorder %s113, %s115
      %p119 = scmp.eq.s32.totalorder %s16, 0
      %p120 = por %p118, %p119
      %p121 = scmp.ne.s32.totalorder %s113, %s115
      %p122 = scmp.eq.s32.totalorder %s21, 1
      %p123 = por %p121, %p122
      %p124 = scmp.ne.s32.totalorder %s115, %s116
      %p125 = scmp.eq.s32.totalorder %s21, 0
      %p126 = por %p124, %p125
      %p127 = scmp.ne.s32.totalorder %s115, %s116
      %p128 = scmp.eq.s32.totalorder %s22, 1
      %p129 = por %p127, %p128
      %p131 = scmp.ne.s32.totalorder %s116, %s130
      %p132 = scmp.eq.s32.totalorder %s22, 0
      %p133 = por %p131, %p132
      %s135 = sadd.s32 %s134, 1
      %p138 = scmp.eq.s32.totalorder %s16, 1
      %p139 = scmp.ne.s32.totalorder %s134, %s136
      %p140 = scmp.eq.s32.totalorder %s16, 0
      %p141 = por %p139, %p140
      %p142 = scmp.ne.s32.totalorder %s134, %s136
      %p143 = scmp.eq.s32.totalorder %s21, 1
      %p144 = por %p142, %p143
      %p145 = scmp.ne.s32.totalorder %s136, %s137
      %p146 = scmp.eq.s32.totalorder %s21, 0
      %p147 = por %p145, %p146
      %p148 = scmp.ne.s32.totalorder %s136, %s137
      %p149 = scmp.eq.s32.totalorder %s22, 1
      %p150 = por %p148, %p149
      %p152 = scmp.ne.s32.totalorder %s137, %s151
      %p153 = scmp.eq.s32.totalorder %s22, 0
      %p154 = por %p152, %p153
      %s156 = sadd.s32 %s155, 1
      %p159 = scmp.eq.s32.totalorder %s16, 1
      %p160 = scmp.ne.s32.totalorder %s155, %s157
      %p161 = scmp.eq.s32.totalorder %s16, 0
      %p162 = por %p160, %p161
      %p163 = scmp.ne.s32.totalorder %s155, %s157
      %p164 = scmp.eq.s32.totalorder %s21, 1
      %p165 = por %p163, %p164
      %p166 = scmp.ne.s32.totalorder %s157, %s158
      %p167 = scmp.eq.s32.totalorder %s21, 0
      %p168 = por %p166, %p167
      %p169 = scmp.ne.s32.totalorder %s157, %s158
      %p170 = scmp.eq.s32.totalorder %s22, 1
      %p171 = por %p169, %p170
      %p173 = scmp.ne.s32.totalorder %s158, %s172
      %p174 = scmp.eq.s32.totalorder %s22, 0
      %p175 = por %p173, %p174
      %s177 = sadd.s32 %s176, 1
      %p180 = scmp.eq.s32.totalorder %s16, 1
      %p181 = scmp.ne.s32.totalorder %s176, %s178
      %p182 = scmp.eq.s32.totalorder %s16, 0
      %p183 = por %p181, %p182
      %p184 = scmp.ne.s32.totalorder %s176, %s178
      %p185 = scmp.eq.s32.totalorder %s21, 1
      %p186 = por %p184, %p185
      %p187 = scmp.ne.s32.totalorder %s178, %s179
      %p188 = scmp.eq.s32.totalorder %s21, 0
      %p189 = por %p187, %p188
      %p190 = scmp.ne.s32.totalorder %s178, %s179
      %p191 = scmp.eq.s32.totalorder %s22, 1
      %p192 = por %p190, %p191
      %p194 = scmp.ne.s32.totalorder %s179, %s193
      %p195 = scmp.eq.s32.totalorder %s22, 0
      %p196 = por %p194, %p195
      %s197 = ssub.s32 %s23, %s35
      %p198 = scmp.eq.s32.totalorder %s197, 0
      %s200 = sadd.s32 %s199, 1
      %s201 = scalar_select %p198, %s199, %s200
      %p204 = pneg %p198
      %p205 = scmp.eq.s32.totalorder %s16, 1
      %p206 = por %p204, %p205
      %p207 = scmp.ne.s32.totalorder %s199, %s202
      %p208 = scmp.eq.s32.totalorder %s16, 0
      %p209 = por %p207, %p208
      %p210 = scmp.ne.s32.totalorder %s199, %s202
      %p211 = scmp.eq.s32.totalorder %s21, 1
      %p212 = por %p210, %p211
      %p213 = scmp.ne.s32.totalorder %s202, %s203
      %p214 = scmp.eq.s32.totalorder %s21, 0
      %p215 = por %p213, %p214
      %p216 = scmp.ne.s32.totalorder %s202, %s203
      %p217 = scmp.eq.s32.totalorder %s22, 1
      %p218 = por %p216, %p217
      %p220 = scmp.ne.s32.totalorder %s203, %s219
      %p221 = scmp.eq.s32.totalorder %s22, 0
      %p222 = por %p220, %p221
      %p223 = scmp.le.s32.totalorder 1, %s16
      %p224 = scmp.lt.s32.totalorder %s16, 3
      %p225 = pnand %p223, %p224
      %p226 = pneg %p225
      // Predicated region
      $region9: #{tpu_custom_call.1} parent=5 // pred_check
        _
      $region10: #{tpu_custom_call.1} parent=5 // pred_check_branch
        %228 = sbr.rel (%p225) target = $region12
      $region11: #{tpu_custom_call.1} parent=5 // pred_region
        %s229 = ssub.s32 %s16, 1
        // Predicated region
        $region13: #{tpu_custom_call.1} parent=11 // pred_check
          %p230 = pneg %p105
        $region14: #{tpu_custom_call.1} parent=11 // pred_check_branch
          %232 = sbr.rel (%p230) target = $region16
        $region15: #{tpu_custom_call.1} parent=11 // pred_region
          _
        $region16: #{tpu_custom_call.1} parent=11 // pred_fallthru
          _
        // Predicated region
        $region17: #{tpu_custom_call.1} parent=11 // pred_check
          %p233 = pneg %p126
        $region18: #{tpu_custom_call.1} parent=11 // pred_check_branch
          %235 = sbr.rel (%p233) target = $region20
        $region19: #{tpu_custom_call.1} parent=11 // pred_region
          _
        $region20: #{tpu_custom_call.1} parent=11 // pred_fallthru
          _
        // Predicated region
        $region21: #{tpu_custom_call.1} parent=11 // pred_check
          %p236 = pneg %p147
        $region22: #{tpu_custom_call.1} parent=11 // pred_check_branch
          %238 = sbr.rel (%p236) target = $region24
        $region23: #{tpu_custom_call.1} parent=11 // pred_region
          _
        $region24: #{tpu_custom_call.1} parent=11 // pred_fallthru
          _
        // Predicated region
        $region25: #{tpu_custom_call.1} parent=11 // pred_check
          %p239 = pneg %p168
        $region26: #{tpu_custom_call.1} parent=11 // pred_check_branch
          %241 = sbr.rel (%p239) target = $region28
        $region27: #{tpu_custom_call.1} parent=11 // pred_region
          _
        $region28: #{tpu_custom_call.1} parent=11 // pred_fallthru
          _
        // Predicated region
        $region29: #{tpu_custom_call.1} parent=11 // pred_check
          %p242 = pneg %p189
        $region30: #{tpu_custom_call.1} parent=11 // pred_check_branch
          %244 = sbr.rel (%p242) target = $region32
        $region31: #{tpu_custom_call.1} parent=11 // pred_region
          _
        $region32: #{tpu_custom_call.1} parent=11 // pred_fallthru
          _
      $region12: #{tpu_custom_call.1} parent=5 // pred_fallthru
        _
      %p245 = scmp.lt.s32.totalorder %s16, 2
      // Predicated region
      $region33: #{tpu_custom_call.1} parent=5 // pred_check
        %p246 = pneg %p245
      $region34: #{tpu_custom_call.1} parent=5 // pred_check_branch
        %248 = sbr.rel (%p246) target = $region36
      $region35: #{tpu_custom_call.1} parent=5 // pred_region
        // Predicated region
        $region37: #{tpu_custom_call.1} parent=35 // pred_check
          %p249 = pneg %p50
        $region38: #{tpu_custom_call.1} parent=35 // pred_check_branch
          %251 = sbr.rel (%p249) target = $region40
        $region39: #{tpu_custom_call.1} parent=35 // pred_region
          %s252 = sand.u32 %s40, 1
          %s253 = sand.u32 %s40, 1
          %s254 = smul.addr %s253, 8
          %s255 = scalar_lea.vmem [#allocation3], %s254
          %s256 = sadd.s32 %s23, %s24
          %s257 = smul.addr %s256, 4
          %s258 = scalar_lea.vmem %s0, %s257
          // Predicated region
          $region41: #{tpu_custom_call.1} parent=39 // pred_check
            _
          $region42: #{tpu_custom_call.1} parent=39 // pred_check_branch
            %260 = sbr.rel (0) target = $region44
          $region43: #{tpu_custom_call.1} parent=39 // pred_region
            // Predicated region
            $region45: #{tpu_custom_call.1} parent=43 // pred_check
              _
            $region46: #{tpu_custom_call.1} parent=43 // pred_check_branch
              %262 = sbr.rel target = $region48
            $region47: #{tpu_custom_call.1} parent=43 // pred_region
              // Predicated region
              $region60: #{tpu_custom_call.1} parent=47 // pred_check
                _
              $region61: #{tpu_custom_call.1} parent=47 // pred_check_branch
                %280 = sbr.rel (0) target = $region63
              $region62: #{tpu_custom_call.1} parent=47 // pred_region
                loop: start=0, step=1, limit=1
                $region64: #{tpu_custom_call.1} parent=62 // loop_pre_header
                  _
                $region65: #{tpu_custom_call.1} parent=62 // loop_header
                  %s282 = sphi 0, %s286
                  %p283 = scmp.ge.s32.totalorder %s282, 1
                  %s287 = sphi %s258, %s258
                  %s288 = sphi %s255, %s255
                $region66: #{tpu_custom_call.1} parent=62 // loop_header_branch
                  %285 = sbr.rel (%p283) target = $region70
                $region67: #{tpu_custom_call.1} parent=62 // loop_body
                  _
                $region68: #{tpu_custom_call.1} parent=62 // loop_footer
                  %s286 = sadd.s32 1, %s282
                $region69: #{tpu_custom_call.1} parent=62 // loop_footer_branch
                  %281 = sbr.rel target = $region65
                $region70: #{tpu_custom_call.1} parent=62 // loop_exit
                  _
                %s290 = ssub.s32 16, 1
                loop: start=0, step=1, limit=1
                $region71: #{tpu_custom_call.1} parent=62 // loop_pre_header
                  _
                $region72: #{tpu_custom_call.1} parent=62 // loop_header
                  %s292 = sphi 0, %s296
                  %p293 = scmp.ge.s32.totalorder %s292, 1
                  %s297 = sphi %s258, %s258
                  %s298 = sphi %s255, %s255
                $region73: #{tpu_custom_call.1} parent=62 // loop_header_branch
                  %295 = sbr.rel (%p293) target = $region77
                $region74: #{tpu_custom_call.1} parent=62 // loop_body
                  %v299 = vld [vmem:[%s297] sm:%s290]
                  %300 = vst [vmem:[%s298] sm:%s290] %v299
                  %v301 = vld [vmem:[%s297 + $0x8] sm:%s290]
                  %302 = vst [vmem:[%s298 + $0x4] sm:%s290] %v301
                $region75: #{tpu_custom_call.1} parent=62 // loop_footer
                  %s296 = sadd.s32 1, %s292
                $region76: #{tpu_custom_call.1} parent=62 // loop_footer_branch
                  %291 = sbr.rel target = $region72
                $region77: #{tpu_custom_call.1} parent=62 // loop_exit
                  _
              $region63: #{tpu_custom_call.1} parent=47 // pred_fallthru
                _
            $region48: #{tpu_custom_call.1} parent=43 // pred_fallthru
              _
            // Predicated region
            $region49: #{tpu_custom_call.1} parent=43 // pred_check
              _
            $region50: #{tpu_custom_call.1} parent=43 // pred_check_branch
              %264 = sbr.rel (0) target = $region52
            $region51: #{tpu_custom_call.1} parent=43 // pred_region
              %s266 = ssub.s32 16, 1
              loop: start=0, step=1, limit=1
              $region53: #{tpu_custom_call.1} parent=51 // loop_pre_header
                _
              $region54: #{tpu_custom_call.1} parent=51 // loop_header
                %s268 = sphi 0, %s272
                %p269 = scmp.ge.s32.totalorder %s268, 1
                %s273 = sphi %s258, %s258
                %s274 = sphi %s255, %s255
              $region55: #{tpu_custom_call.1} parent=51 // loop_header_branch
                %271 = sbr.rel (%p269) target = $region59
              $region56: #{tpu_custom_call.1} parent=51 // loop_body
                %v275 = vld [vmem:[%s273] sm:%s266]
                %276 = vst [vmem:[%s274] sm:%s266] %v275
                %v277 = vld [vmem:[%s273 + $0x8] sm:%s266]
                %278 = vst [vmem:[%s274 + $0x4] sm:%s266] %v277
              $region57: #{tpu_custom_call.1} parent=51 // loop_footer
                %s272 = sadd.s32 1, %s268
              $region58: #{tpu_custom_call.1} parent=51 // loop_footer_branch
                %267 = sbr.rel target = $region54
              $region59: #{tpu_custom_call.1} parent=51 // loop_exit
                _
            $region52: #{tpu_custom_call.1} parent=43 // pred_fallthru
              _
          $region44: #{tpu_custom_call.1} parent=39 // pred_fallthru
            _
          %303 = vnop
        $region40: #{tpu_custom_call.1} parent=35 // pred_fallthru
          _
        // Predicated region
        $region78: #{tpu_custom_call.1} parent=35 // pred_check
          %p304 = pneg %p78
        $region79: #{tpu_custom_call.1} parent=35 // pred_check_branch
          %306 = sbr.rel (%p304) target = $region81
        $region80: #{tpu_custom_call.1} parent=35 // pred_region
          %s307 = sand.u32 %s68, 1
          %s308 = sand.u32 %s68, 1
          %s309 = smul.addr %s308, 8
          %s310 = scalar_lea.vmem [#allocation4], %s309
          %s311 = sadd.s32 %s23, %s24
          %s312 = smul.addr %s311, 4
          %s313 = scalar_lea.vmem %s1, %s312
          // Predicated region
          $region82: #{tpu_custom_call.1} parent=80 // pred_check
            _
          $region83: #{tpu_custom_call.1} parent=80 // pred_check_branch
            %315 = sbr.rel (0) target = $region85
          $region84: #{tpu_custom_call.1} parent=80 // pred_region
            // Predicated region
            $region86: #{tpu_custom_call.1} parent=84 // pred_check
              _
            $region87: #{tpu_custom_call.1} parent=84 // pred_check_branch
              %317 = sbr.rel target = $region89
            $region88: #{tpu_custom_call.1} parent=84 // pred_region
              // Predicated region
              $region101: #{tpu_custom_call.1} parent=88 // pred_check
                _
              $region102: #{tpu_custom_call.1} parent=88 // pred_check_branch
                %335 = sbr.rel (0) target = $region104
              $region103: #{tpu_custom_call.1} parent=88 // pred_region
                loop: start=0, step=1, limit=1
                $region105: #{tpu_custom_call.1} parent=103 // loop_pre_header
                  _
                $region106: #{tpu_custom_call.1} parent=103 // loop_header
                  %s337 = sphi 0, %s341
                  %p338 = scmp.ge.s32.totalorder %s337, 1
                  %s342 = sphi %s313, %s313
                  %s343 = sphi %s310, %s310
                $region107: #{tpu_custom_call.1} parent=103 // loop_header_branch
                  %340 = sbr.rel (%p338) target = $region111
                $region108: #{tpu_custom_call.1} parent=103 // loop_body
                  _
                $region109: #{tpu_custom_call.1} parent=103 // loop_footer
                  %s341 = sadd.s32 1, %s337
                $region110: #{tpu_custom_call.1} parent=103 // loop_footer_branch
                  %336 = sbr.rel target = $region106
                $region111: #{tpu_custom_call.1} parent=103 // loop_exit
                  _
                %s345 = ssub.s32 16, 1
                loop: start=0, step=1, limit=1
                $region112: #{tpu_custom_call.1} parent=103 // loop_pre_header
                  _
                $region113: #{tpu_custom_call.1} parent=103 // loop_header
                  %s347 = sphi 0, %s351
                  %p348 = scmp.ge.s32.totalorder %s347, 1
                  %s352 = sphi %s313, %s313
                  %s353 = sphi %s310, %s310
                $region114: #{tpu_custom_call.1} parent=103 // loop_header_branch
                  %350 = sbr.rel (%p348) target = $region118
                $region115: #{tpu_custom_call.1} parent=103 // loop_body
                  %v354 = vld [vmem:[%s352] sm:%s345]
                  %355 = vst [vmem:[%s353] sm:%s345] %v354
                  %v356 = vld [vmem:[%s352 + $0x8] sm:%s345]
                  %357 = vst [vmem:[%s353 + $0x4] sm:%s345] %v356
                $region116: #{tpu_custom_call.1} parent=103 // loop_footer
                  %s351 = sadd.s32 1, %s347
                $region117: #{tpu_custom_call.1} parent=103 // loop_footer_branch
                  %346 = sbr.rel target = $region113
                $region118: #{tpu_custom_call.1} parent=103 // loop_exit
                  _
              $region104: #{tpu_custom_call.1} parent=88 // pred_fallthru
                _
            $region89: #{tpu_custom_call.1} parent=84 // pred_fallthru
              _
            // Predicated region
            $region90: #{tpu_custom_call.1} parent=84 // pred_check
              _
            $region91: #{tpu_custom_call.1} parent=84 // pred_check_branch
              %319 = sbr.rel (0) target = $region93
            $region92: #{tpu_custom_call.1} parent=84 // pred_region
              %s321 = ssub.s32 16, 1
              loop: start=0, step=1, limit=1
              $region94: #{tpu_custom_call.1} parent=92 // loop_pre_header
                _
              $region95: #{tpu_custom_call.1} parent=92 // loop_header
                %s323 = sphi 0, %s327
                %p324 = scmp.ge.s32.totalorder %s323, 1
                %s328 = sphi %s313, %s313
                %s329 = sphi %s310, %s310
              $region96: #{tpu_custom_call.1} parent=92 // loop_header_branch
                %326 = sbr.rel (%p324) target = $region100
              $region97: #{tpu_custom_call.1} parent=92 // loop_body
                %v330 = vld [vmem:[%s328] sm:%s321]
                %331 = vst [vmem:[%s329] sm:%s321] %v330
                %v332 = vld [vmem:[%s328 + $0x8] sm:%s321]
                %333 = vst [vmem:[%s329 + $0x4] sm:%s321] %v332
              $region98: #{tpu_custom_call.1} parent=92 // loop_footer
                %s327 = sadd.s32 1, %s323
              $region99: #{tpu_custom_call.1} parent=92 // loop_footer_branch
                %322 = sbr.rel target = $region95
              $region100: #{tpu_custom_call.1} parent=92 // loop_exit
                _
            $region93: #{tpu_custom_call.1} parent=84 // pred_fallthru
              _
          $region85: #{tpu_custom_call.1} parent=80 // pred_fallthru
            _
          %358 = vnop
        $region81: #{tpu_custom_call.1} parent=35 // pred_fallthru
          _
      $region36: #{tpu_custom_call.1} parent=5 // pred_fallthru
        _
      %p359 = scmp.le.s32.totalorder 1, %s16
      %p360 = scmp.lt.s32.totalorder %s16, 3
      %p361 = pnand %p359, %p360
      %p362 = pneg %p361
      // Predicated region
      $region119: #{tpu_custom_call.1} parent=5 // pred_check
        _
      $region120: #{tpu_custom_call.1} parent=5 // pred_check_branch
        %364 = sbr.rel (%p361) target = $region122
      $region121: #{tpu_custom_call.1} parent=5 // pred_region
        %s365 = ssub.s32 %s16, 1
        %s366 = sand.u32 %s43, 1
        %s367 = sand.u32 %s43, 1
        %s368 = smul.addr %s367, 8
        %s369 = scalar_lea.vmem [#allocation3], %s368
        // Predicated region
        $region123: #{tpu_custom_call.1} parent=121 // pred_check
          %p370 = pneg %p56
        $region124: #{tpu_custom_call.1} parent=121 // pred_check_branch
          %372 = sbr.rel (%p370) target = $region126
        $region125: #{tpu_custom_call.1} parent=121 // pred_region
          _
        $region126: #{tpu_custom_call.1} parent=121 // pred_fallthru
          _
        %s373 = sand.u32 %s71, 1
        %s374 = sand.u32 %s71, 1
        %s375 = smul.addr %s374, 8
        %s376 = scalar_lea.vmem [#allocation4], %s375
        // Predicated region
        $region127: #{tpu_custom_call.1} parent=121 // pred_check
          %p377 = pneg %p84
        $region128: #{tpu_custom_call.1} parent=121 // pred_check_branch
          %379 = sbr.rel (%p377) target = $region130
        $region129: #{tpu_custom_call.1} parent=121 // pred_region
          _
        $region130: #{tpu_custom_call.1} parent=121 // pred_fallthru
          _
        %s380 = sand.u32 %s43, 1
        %s381 = sand.u32 %s43, 1
        %s382 = smul.addr %s381, 8
        %s383 = scalar_lea.vmem [#allocation3], %s382
        %p384 = pneg %p56
        %p385 = pneg %p53
        %s386 = sand.u32 %s71, 1
        %s387 = sand.u32 %s71, 1
        %s388 = smul.addr %s387, 8
        %s389 = scalar_lea.vmem [#allocation4], %s388
        %p390 = pneg %p84
        %p391 = pneg %p81
        %p392 = pneg %p105
        %p393 = pneg %p102
        %p394 = pneg %p126
        %p395 = pneg %p123
        %p396 = pneg %p147
        %p397 = pneg %p144
        %p398 = pneg %p168
        %p399 = pneg %p165
        %p400 = pneg %p189
        %p401 = pneg %p186
        %p402 = pneg %p215
        %p403 = pneg %p212
        %s404 = sand.u32 %s202, 1
        %s405 = scalar_lea.sflag [#allocation6], %s404
        %s406 = sand.u32 %s202, 1
        %s407 = smul.addr %s406, 8
        %s408 = scalar_lea.vmem [#allocation5], %s407
        %s409 = sadd.s32 %s25, %s26
        %s410 = sadd.s32 %s25, %s26
        %p412 = scmp.eq.s32.totalorder %s26, 0
        // Predicated region
        $region131: #{tpu_custom_call.1} parent=121 // pred_check
          %p413 = pneg %p412
        $region132: #{tpu_custom_call.1} parent=121 // pred_check_branch
          %415 = sbr.rel (%p413) target = $region134
        $region133: #{tpu_custom_call.1} parent=121 // pred_region
          %vm416 = vcmask 138240
          %417 = vst.msk [vmem:[#allocation2] sm:$0xff] %vm416, 0.0
          %418 = vst.msk [vmem:[#allocation2 + $0x8] sm:$0xff] %vm416, 0.0
          %419 = vst.msk [vmem:[#allocation2 + $0x10] sm:$0xff] %vm416, 0.0
          %420 = vst.msk [vmem:[#allocation2 + $0x18] sm:$0xff] %vm416, 0.0
          %vm421 = vcmask 134144
          %422 = vst.msk [vmem:[#allocation2 + $0x20] sm:$0xf] %vm421, 0.0
        $region134: #{tpu_custom_call.1} parent=121 // pred_fallthru
          _
        %v423 = vld [vmem:[%s369] sm:$0xf]
        %v424 = vld [vmem:[%s369 + $0x4] sm:$0xf]
        %v425 = vld [vmem:[%s376] sm:$0xf]
        %v426 = vld [vmem:[%s376 + $0x4] sm:$0xf]
        %v427 = vld [vmem:[%s2] sm:$0xf]
        %v428 = vld [vmem:[%s2 + $0x4] sm:$0x1]
        %v429 = vld [vmem:[%s3] sm:$0xf]
        %v430 = vld [vmem:[%s3 + $0x4] sm:$0x1]
        %v431 = vld [vmem:[%s4] sm:$0xf]
        %v432 = vld [vmem:[%s4 + $0x4] sm:$0xf]
        %v433 = vld [vmem:[%s4 + $0x8] sm:$0xf]
        %v434 = vld [vmem:[%s4 + $0xc] sm:$0xf]
        %v435 = vld [vmem:[%s5] sm:$0xf]
        %v436 = vld [vmem:[%s5 + $0x4] sm:$0xf]
        %v437 = vld [vmem:[%s5 + $0x8] sm:$0xf]
        %v438 = vld [vmem:[%s5 + $0xc] sm:$0xf]
        %v439 = vld [vmem:[%s6] sm:$0xff]
        %v440 = vld [vmem:[%s6 + $0x8] sm:$0xff]
        %v441 = vld [vmem:[%s6 + $0x10] sm:$0xff]
        %v442 = vld [vmem:[%s6 + $0x18] sm:$0xff]
        %v443 = vld [vmem:[%s6 + $0x20] sm:$0xf]
        %v446 = vunpack.c.l.b16 %v427
        %v447 = vunpack.c.l.b16 %v428
        %v448 = vpack.c.b16 %v447, %v446
        %v451 = vunpack.c.l.b16 %v423
        %v452 = vunpack.c.l.b16 %v424
        %v453 = vpack.c.b16 %v452, %v451
        %vm455 = vcmask 130048
        %v457 = vsel %vm455, %v448, 0
        %459 = vmatpush.bf16.msra.mxu0 0
        %460 = vmatpush.bf16.msra.mxu0 0
        %461 = vmatpush.bf16.msra.mxu0 0
        %462 = vmatpush.bf16.msra.mxu0 0
        %463 = vmatpush.bf16.msra.mxu0 0
        %464 = vmatpush.bf16.msra.mxu0 0
        %465 = vmatpush.bf16.msra.mxu0 0
        %466 = vmatpush.bf16.msra.mxu0 %v453
        %467 = vmatmul.bf16.gmra.mxu0 %v457
        %v468 = vpop.f32.mrf.mxu0
        %v469 = vadd.f32 0.0, %v468
        %v470 = vpop.f32.mrf.mxu0
        %v471 = vadd.f32 0.0, %v470
        %472 = vdwg.mxu0
        %v475 = vunpack.c.l.b16 %v429
        %v476 = vunpack.c.l.b16 %v430
        %v477 = vpack.c.b16 %v476, %v475
        %v479 = vsel %vm455, %v477, 0
        %481 = vmatpush.bf16.msra.mxu0 0
        %482 = vmatpush.bf16.msra.mxu0 0
        %483 = vmatpush.bf16.msra.mxu0 0
        %484 = vmatpush.bf16.msra.mxu0 0
        %485 = vmatpush.bf16.msra.mxu0 0
        %486 = vmatpush.bf16.msra.mxu0 0
        %487 = vmatpush.bf16.msra.mxu0 0
        %488 = vmatpush.bf16.msra.mxu0 %v453
        %489 = vmatmul.bf16.gmra.mxu0 %v479
        %v490 = vpop.f32.mrf.mxu0
        %v491 = vadd.f32 0.0, %v490
        %v492 = vpop.f32.mrf.mxu0
        %v493 = vadd.f32 0.0, %v492
        %494 = vdwg.mxu0
        %v497 = vunpack.c.l.b16 %v425
        %v498 = vunpack.c.l.b16 %v426
        %v499 = vpack.c.b16 %v498, %v497
        %501 = vmatpush.bf16.msra.mxu0 0
        %502 = vmatpush.bf16.msra.mxu0 0
        %503 = vmatpush.bf16.msra.mxu0 0
        %504 = vmatpush.bf16.msra.mxu0 0
        %505 = vmatpush.bf16.msra.mxu0 0
        %506 = vmatpush.bf16.msra.mxu0 0
        %507 = vmatpush.bf16.msra.mxu0 0
        %508 = vmatpush.bf16.msra.mxu0 %v499
        %509 = vmatmul.bf16.gmra.mxu0 %v457
        %v510 = vpop.f32.mrf.mxu0
        %v511 = vadd.f32 0.0, %v510
        %v512 = vpop.f32.mrf.mxu0
        %v513 = vadd.f32 0.0, %v512
        %514 = vdwg.mxu0
        %515 = vmatpush.bf16.msra.mxu0 0
        %516 = vmatpush.bf16.msra.mxu0 0
        %517 = vmatpush.bf16.msra.mxu0 0
        %518 = vmatpush.bf16.msra.mxu0 0
        %519 = vmatpush.bf16.msra.mxu0 0
        %520 = vmatpush.bf16.msra.mxu0 0
        %521 = vmatpush.bf16.msra.mxu0 0
        %522 = vmatpush.bf16.msra.mxu0 %v499
        %523 = vmatmul.bf16.gmra.mxu0 %v479
        %v524 = vpop.f32.mrf.mxu0
        %v525 = vadd.f32 0.0, %v524
        %v526 = vpop.f32.mrf.mxu0
        %v527 = vadd.f32 0.0, %v526
        %528 = vdwg.mxu0
        %vm531 = vcmask 1040384
        %v532 = vrot.slane %v469, 7
        %v533 = vrot.slane %v471, 7
        %v534 = vsel %vm531, %v532, %v533
        %535 = vrot.lane.b32.xlu0 %v532, 96
        %v536 = vpop.permute.xlu0 %535
        %537 = vrot.lane.b32.xlu0 %v534, 96
        %v538 = vpop.permute.xlu0 %537
        %vm541 = vcmask 1041408
        %v542 = vrot.slane %v469, 6
        %v543 = vrot.slane %v471, 6
        %v544 = vsel %vm541, %v542, %v543
        %545 = vrot.lane.b32.xlu0 %v542, 64
        %v546 = vpop.permute.xlu0 %545
        %547 = vrot.lane.b32.xlu0 %v544, 64
        %v548 = vpop.permute.xlu0 %547
        %vm551 = vcmask 1042432
        %v552 = vrot.slane %v469, 5
        %v553 = vrot.slane %v471, 5
        %v554 = vsel %vm551, %v552, %v553
        %555 = vrot.lane.b32.xlu0 %v552, 32
        %v556 = vpop.permute.xlu0 %555
        %557 = vrot.lane.b32.xlu0 %v554, 32
        %v558 = vpop.permute.xlu0 %557
        %v561 = vsel %vm531, %v471, %v536
        %v562 = vsel %vm541, %v538, %v546
        %v563 = vsel %vm551, %v548, %v556
        %v564 = vpack.c.bf16 %v561, %v469
        %v565 = vpack.c.bf16 %v563, %v562
        %v566 = vpack.c.bf16 %v558, %v558
        %v569 = vrot.slane %v491, 7
        %v570 = vrot.slane %v493, 7
        %v571 = vsel %vm531, %v569, %v570
        %572 = vrot.lane.b32.xlu0 %v569, 96
        %v573 = vpop.permute.xlu0 %572
        %574 = vrot.lane.b32.xlu0 %v571, 96
        %v575 = vpop.permute.xlu0 %574
        %v578 = vrot.slane %v491, 6
        %v579 = vrot.slane %v493, 6
        %v580 = vsel %vm541, %v578, %v579
        %581 = vrot.lane.b32.xlu0 %v578, 64
        %v582 = vpop.permute.xlu0 %581
        %583 = vrot.lane.b32.xlu0 %v580, 64
        %v584 = vpop.permute.xlu0 %583
        %v587 = vrot.slane %v491, 5
        %v588 = vrot.slane %v493, 5
        %v589 = vsel %vm551, %v587, %v588
        %590 = vrot.lane.b32.xlu0 %v587, 32
        %v591 = vpop.permute.xlu0 %590
        %592 = vrot.lane.b32.xlu0 %v589, 32
        %v593 = vpop.permute.xlu0 %592
        %v596 = vsel %vm531, %v493, %v573
        %v597 = vsel %vm541, %v575, %v582
        %v598 = vsel %vm551, %v584, %v591
        %v599 = vpack.c.bf16 %v596, %v491
        %v600 = vpack.c.bf16 %v598, %v597
        %v601 = vpack.c.bf16 %v593, %v593
        %v606 = vunpack.c.l.b16 %v431
        %v607 = vunpack.c.l.b16 %v432
        %v608 = vunpack.c.l.b16 %v433
        %v609 = vunpack.c.l.b16 %v434
        %v610 = vpack.c.b16 %v607, %v606
        %v611 = vpack.c.b16 %v609, %v608
        %vm614 = vcmask 261120
        %v616 = vsel %vm614, %v564, 0
        %v619 = vsel %vm614, %v565, 0
        %v622 = vsel %vm614, %v566, 0
        %624 = vmatpush.bf16.msra.mxu0 0
        %625 = vmatpush.bf16.msra.mxu0 0
        %626 = vmatpush.bf16.msra.mxu0 0
        %627 = vmatpush.bf16.msra.mxu0 0
        %628 = vmatpush.bf16.msra.mxu0 0
        %629 = vmatpush.bf16.msra.mxu0 0
        %630 = vmatpush.bf16.msra.mxu0 %v611
        %631 = vmatpush.bf16.msra.mxu0 %v610
        %632 = vmatmul.bf16.gmra.mxu0 %v616
        %v633 = vpop.f32.mrf.mxu0
        %v634 = vadd.f32 0.0, %v633
        %v635 = vpop.f32.mrf.mxu0
        %v636 = vadd.f32 0.0, %v635
        %637 = vmatmul.bf16.gmra.mxu0 %v619
        %v638 = vpop.f32.mrf.mxu0
        %v639 = vadd.f32 0.0, %v638
        %v640 = vpop.f32.mrf.mxu0
        %v641 = vadd.f32 0.0, %v640
        %642 = vmatmul.bf16.gmra.mxu0 %v622
        %v643 = vpop.f32.mrf.mxu0
        %v644 = vadd.f32 0.0, %v643
        %v645 = vpop.f32.mrf.mxu0
        %646 = vdwg.mxu0
        %v651 = vunpack.c.l.b16 %v435
        %v652 = vunpack.c.l.b16 %v436
        %v653 = vunpack.c.l.b16 %v437
        %v654 = vunpack.c.l.b16 %v438
        %v655 = vpack.c.b16 %v652, %v651
        %v656 = vpack.c.b16 %v654, %v653
        %v660 = vsel %vm614, %v599, 0
        %v663 = vsel %vm614, %v600, 0
        %v666 = vsel %vm614, %v601, 0
        %668 = vmatpush.bf16.msra.mxu0 0
        %669 = vmatpush.bf16.msra.mxu0 0
        %670 = vmatpush.bf16.msra.mxu0 0
        %671 = vmatpush.bf16.msra.mxu0 0
        %672 = vmatpush.bf16.msra.mxu0 0
        %673 = vmatpush.bf16.msra.mxu0 0
        %674 = vmatpush.bf16.msra.mxu0 %v656
        %675 = vmatpush.bf16.msra.mxu0 %v655
        %676 = vmatmul.bf16.gmra.mxu0 %v660
        %v677 = vpop.f32.mrf.mxu0
        %v678 = vadd.f32 0.0, %v677
        %v679 = vpop.f32.mrf.mxu0
        %v680 = vadd.f32 0.0, %v679
        %681 = vmatmul.bf16.gmra.mxu0 %v663
        %v682 = vpop.f32.mrf.mxu0
        %v683 = vadd.f32 0.0, %v682
        %v684 = vpop.f32.mrf.mxu0
        %v685 = vadd.f32 0.0, %v684
        %686 = vmatmul.bf16.gmra.mxu0 %v666
        %v687 = vpop.f32.mrf.mxu0
        %v688 = vadd.f32 0.0, %v687
        %v689 = vpop.f32.mrf.mxu0
        %690 = vdwg.mxu0
        %691 = vmatpush.bf16.msra.mxu0 0
        %692 = vmatpush.bf16.msra.mxu0 0
        %693 = vmatpush.bf16.msra.mxu0 0
        %694 = vmatpush.bf16.msra.mxu0 0
        %695 = vmatpush.bf16.msra.mxu0 0
        %696 = vmatpush.bf16.msra.mxu0 0
        %697 = vmatpush.bf16.msra.mxu0 %v656
        %698 = vmatpush.bf16.msra.mxu0 %v655
        %699 = vmatmul.bf16.gmra.mxu0 %v616
        %v700 = vpop.f32.mrf.mxu0
        %v701 = vadd.f32 0.0, %v700
        %v702 = vpop.f32.mrf.mxu0
        %v703 = vadd.f32 0.0, %v702
        %704 = vmatmul.bf16.gmra.mxu0 %v619
        %v705 = vpop.f32.mrf.mxu0
        %v706 = vadd.f32 0.0, %v705
        %v707 = vpop.f32.mrf.mxu0
        %v708 = vadd.f32 0.0, %v707
        %709 = vmatmul.bf16.gmra.mxu0 %v622
        %v710 = vpop.f32.mrf.mxu0
        %v711 = vadd.f32 0.0, %v710
        %v712 = vpop.f32.mrf.mxu0
        %713 = vdwg.mxu0
        %714 = vmatpush.bf16.msra.mxu0 0
        %715 = vmatpush.bf16.msra.mxu0 0
        %716 = vmatpush.bf16.msra.mxu0 0
        %717 = vmatpush.bf16.msra.mxu0 0
        %718 = vmatpush.bf16.msra.mxu0 0
        %719 = vmatpush.bf16.msra.mxu0 0
        %720 = vmatpush.bf16.msra.mxu0 %v611
        %721 = vmatpush.bf16.msra.mxu0 %v610
        %722 = vmatmul.bf16.gmra.mxu0 %v660
        %v723 = vpop.f32.mrf.mxu0
        %v724 = vadd.f32 0.0, %v723
        %v725 = vpop.f32.mrf.mxu0
        %v726 = vadd.f32 0.0, %v725
        %727 = vmatmul.bf16.gmra.mxu0 %v663
        %v728 = vpop.f32.mrf.mxu0
        %v729 = vadd.f32 0.0, %v728
        %v730 = vpop.f32.mrf.mxu0
        %v731 = vadd.f32 0.0, %v730
        %732 = vmatmul.bf16.gmra.mxu0 %v666
        %v733 = vpop.f32.mrf.mxu0
        %v734 = vadd.f32 0.0, %v733
        %v735 = vpop.f32.mrf.mxu0
        %736 = vdwg.mxu0
        %v739 = vrot.slane %v511, 7
        %v740 = vrot.slane %v513, 7
        %v741 = vsel %vm531, %v739, %v740
        %742 = vrot.lane.b32.xlu0 %v739, 96
        %v743 = vpop.permute.xlu0 %742
        %744 = vrot.lane.b32.xlu0 %v741, 96
        %v745 = vpop.permute.xlu0 %744
        %v748 = vrot.slane %v511, 6
        %v749 = vrot.slane %v513, 6
        %v750 = vsel %vm541, %v748, %v749
        %751 = vrot.lane.b32.xlu0 %v748, 64
        %v752 = vpop.permute.xlu0 %751
        %753 = vrot.lane.b32.xlu0 %v750, 64
        %v754 = vpop.permute.xlu0 %753
        %v757 = vrot.slane %v511, 5
        %v758 = vrot.slane %v513, 5
        %v759 = vsel %vm551, %v757, %v758
        %760 = vrot.lane.b32.xlu0 %v757, 32
        %v761 = vpop.permute.xlu0 %760
        %762 = vrot.lane.b32.xlu0 %v759, 32
        %v763 = vpop.permute.xlu0 %762
        %v766 = vsel %vm531, %v513, %v743
        %v767 = vsel %vm541, %v745, %v752
        %v768 = vsel %vm551, %v754, %v761
        %v769 = vpack.c.bf16 %v766, %v511
        %v770 = vpack.c.bf16 %v768, %v767
        %v771 = vpack.c.bf16 %v763, %v763
        %v774 = vrot.slane %v525, 7
        %v775 = vrot.slane %v527, 7
        %v776 = vsel %vm531, %v774, %v775
        %777 = vrot.lane.b32.xlu0 %v774, 96
        %v778 = vpop.permute.xlu0 %777
        %779 = vrot.lane.b32.xlu0 %v776, 96
        %v780 = vpop.permute.xlu0 %779
        %v783 = vrot.slane %v525, 6
        %v784 = vrot.slane %v527, 6
        %v785 = vsel %vm541, %v783, %v784
        %786 = vrot.lane.b32.xlu0 %v783, 64
        %v787 = vpop.permute.xlu0 %786
        %788 = vrot.lane.b32.xlu0 %v785, 64
        %v789 = vpop.permute.xlu0 %788
        %v792 = vrot.slane %v525, 5
        %v793 = vrot.slane %v527, 5
        %v794 = vsel %vm551, %v792, %v793
        %795 = vrot.lane.b32.xlu0 %v792, 32
        %v796 = vpop.permute.xlu0 %795
        %797 = vrot.lane.b32.xlu0 %v794, 32
        %v798 = vpop.permute.xlu0 %797
        %v801 = vsel %vm531, %v527, %v778
        %v802 = vsel %vm541, %v780, %v787
        %v803 = vsel %vm551, %v789, %v796
        %v804 = vpack.c.bf16 %v801, %v525
        %v805 = vpack.c.bf16 %v803, %v802
        %v806 = vpack.c.bf16 %v798, %v798
        %v808 = vsel %vm614, %v769, 0
        %v811 = vsel %vm614, %v770, 0
        %v814 = vsel %vm614, %v771, 0
        %816 = vmatpush.bf16.msra.mxu0 0
        %817 = vmatpush.bf16.msra.mxu0 0
        %818 = vmatpush.bf16.msra.mxu0 0
        %819 = vmatpush.bf16.msra.mxu0 0
        %820 = vmatpush.bf16.msra.mxu0 0
        %821 = vmatpush.bf16.msra.mxu0 0
        %822 = vmatpush.bf16.msra.mxu0 %v611
        %823 = vmatpush.bf16.msra.mxu0 %v610
        %824 = vmatmul.bf16.gmra.mxu0 %v808
        %v825 = vpop.f32.mrf.mxu0
        %v826 = vadd.f32 0.0, %v825
        %v827 = vpop.f32.mrf.mxu0
        %v828 = vadd.f32 0.0, %v827
        %829 = vmatmul.bf16.gmra.mxu0 %v811
        %v830 = vpop.f32.mrf.mxu0
        %v831 = vadd.f32 0.0, %v830
        %v832 = vpop.f32.mrf.mxu0
        %v833 = vadd.f32 0.0, %v832
        %834 = vmatmul.bf16.gmra.mxu0 %v814
        %v835 = vpop.f32.mrf.mxu0
        %v836 = vadd.f32 0.0, %v835
        %v837 = vpop.f32.mrf.mxu0
        %838 = vdwg.mxu0
        %v840 = vsel %vm614, %v804, 0
        %v843 = vsel %vm614, %v805, 0
        %v846 = vsel %vm614, %v806, 0
        %848 = vmatpush.bf16.msra.mxu0 0
        %849 = vmatpush.bf16.msra.mxu0 0
        %850 = vmatpush.bf16.msra.mxu0 0
        %851 = vmatpush.bf16.msra.mxu0 0
        %852 = vmatpush.bf16.msra.mxu0 0
        %853 = vmatpush.bf16.msra.mxu0 0
        %854 = vmatpush.bf16.msra.mxu0 %v656
        %855 = vmatpush.bf16.msra.mxu0 %v655
        %856 = vmatmul.bf16.gmra.mxu0 %v840
        %v857 = vpop.f32.mrf.mxu0
        %v858 = vadd.f32 0.0, %v857
        %v859 = vpop.f32.mrf.mxu0
        %v860 = vadd.f32 0.0, %v859
        %861 = vmatmul.bf16.gmra.mxu0 %v843
        %v862 = vpop.f32.mrf.mxu0
        %v863 = vadd.f32 0.0, %v862
        %v864 = vpop.f32.mrf.mxu0
        %v865 = vadd.f32 0.0, %v864
        %866 = vmatmul.bf16.gmra.mxu0 %v846
        %v867 = vpop.f32.mrf.mxu0
        %v868 = vadd.f32 0.0, %v867
        %v869 = vpop.f32.mrf.mxu0
        %870 = vdwg.mxu0
        %871 = vmatpush.bf16.msra.mxu0 0
        %872 = vmatpush.bf16.msra.mxu0 0
        %873 = vmatpush.bf16.msra.mxu0 0
        %874 = vmatpush.bf16.msra.mxu0 0
        %875 = vmatpush.bf16.msra.mxu0 0
        %876 = vmatpush.bf16.msra.mxu0 0
        %877 = vmatpush.bf16.msra.mxu0 %v656
        %878 = vmatpush.bf16.msra.mxu0 %v655
        %879 = vmatmul.bf16.gmra.mxu0 %v808
        %v880 = vpop.f32.mrf.mxu0
        %v881 = vadd.f32 0.0, %v880
        %v882 = vpop.f32.mrf.mxu0
        %v883 = vadd.f32 0.0, %v882
        %884 = vmatmul.bf16.gmra.mxu0 %v811
        %v885 = vpop.f32.mrf.mxu0
        %v886 = vadd.f32 0.0, %v885
        %v887 = vpop.f32.mrf.mxu0
        %v888 = vadd.f32 0.0, %v887
        %889 = vmatmul.bf16.gmra.mxu0 %v814
        %v890 = vpop.f32.mrf.mxu0
        %v891 = vadd.f32 0.0, %v890
        %v892 = vpop.f32.mrf.mxu0
        %893 = vdwg.mxu0
        %894 = vmatpush.bf16.msra.mxu0 0
        %895 = vmatpush.bf16.msra.mxu0 0
        %896 = vmatpush.bf16.msra.mxu0 0
        %897 = vmatpush.bf16.msra.mxu0 0
        %898 = vmatpush.bf16.msra.mxu0 0
        %899 = vmatpush.bf16.msra.mxu0 0
        %900 = vmatpush.bf16.msra.mxu0 %v611
        %901 = vmatpush.bf16.msra.mxu0 %v610
        %902 = vmatmul.bf16.gmra.mxu0 %v840
        %v903 = vpop.f32.mrf.mxu0
        %v904 = vadd.f32 0.0, %v903
        %v905 = vpop.f32.mrf.mxu0
        %v906 = vadd.f32 0.0, %v905
        %907 = vmatmul.bf16.gmra.mxu0 %v843
        %v908 = vpop.f32.mrf.mxu0
        %v909 = vadd.f32 0.0, %v908
        %v910 = vpop.f32.mrf.mxu0
        %v911 = vadd.f32 0.0, %v910
        %912 = vmatmul.bf16.gmra.mxu0 %v846
        %v913 = vpop.f32.mrf.mxu0
        %v914 = vadd.f32 0.0, %v913
        %v915 = vpop.f32.mrf.mxu0
        %916 = vdwg.mxu0
        %v917 = vsub.f32 %v634, %v678
        %v918 = vsub.f32 %v636, %v680
        %v919 = vsub.f32 %v639, %v683
        %v920 = vsub.f32 %v641, %v685
        %v921 = vsub.f32 %v644, %v688
        %v922 = vadd.f32 %v701, %v724
        %v923 = vadd.f32 %v703, %v726
        %v924 = vadd.f32 %v706, %v729
        %v925 = vadd.f32 %v708, %v731
        %v926 = vadd.f32 %v711, %v734
        %v927 = vsub.f32 %v826, %v858
        %v928 = vsub.f32 %v828, %v860
        %v929 = vsub.f32 %v831, %v863
        %v930 = vsub.f32 %v833, %v865
        %v931 = vsub.f32 %v836, %v868
        %v932 = vadd.f32 %v881, %v904
        %v933 = vadd.f32 %v883, %v906
        %v934 = vadd.f32 %v886, %v909
        %v935 = vadd.f32 %v888, %v911
        %v936 = vadd.f32 %v891, %v914
        %v937 = vmul.f32 %v917, %v917
        %v938 = vmul.f32 %v918, %v918
        %v939 = vmul.f32 %v919, %v919
        %v940 = vmul.f32 %v920, %v920
        %v941 = vmul.f32 %v921, %v921
        %v942 = vmul.f32 %v922, %v922
        %v943 = vmul.f32 %v923, %v923
        %v944 = vmul.f32 %v924, %v924
        %v945 = vmul.f32 %v925, %v925
        %v946 = vmul.f32 %v926, %v926
        %v947 = vadd.f32 %v937, %v942
        %v948 = vadd.f32 %v938, %v943
        %v949 = vadd.f32 %v939, %v944
        %v950 = vadd.f32 %v940, %v945
        %v951 = vadd.f32 %v941, %v946
        %v952 = vmul.f32 %v927, %v927
        %v953 = vmul.f32 %v928, %v928
        %v954 = vmul.f32 %v929, %v929
        %v955 = vmul.f32 %v930, %v930
        %v956 = vmul.f32 %v931, %v931
        %v957 = vmul.f32 %v932, %v932
        %v958 = vmul.f32 %v933, %v933
        %v959 = vmul.f32 %v934, %v934
        %v960 = vmul.f32 %v935, %v935
        %v961 = vmul.f32 %v936, %v936
        %v962 = vadd.f32 %v952, %v957
        %v963 = vadd.f32 %v953, %v958
        %v964 = vadd.f32 %v954, %v959
        %v965 = vadd.f32 %v955, %v960
        %v966 = vadd.f32 %v956, %v961
        %v967 = vrsqrt.pop %v947
        %v968 = vmul.f32 %v967, %v947
        %v969 = vmul.f32 %v968, %v967
        %v970 = vmul.f32 0.5, %v969
        %v971 = vsub.f32 1.5, %v970
        %v972 = vmul.f32 %v967, %v971
        %vm973 = vweird.f32 %v947
        %vm974 = vweird.f32 %v967
        %vm975 = vmor %vm973, %vm974
        %v976 = vsel %vm975, %v967, %v972
        %v977 = vrsqrt.pop %v948
        %v978 = vmul.f32 %v977, %v948
        %v979 = vmul.f32 %v978, %v977
        %v980 = vmul.f32 0.5, %v979
        %v981 = vsub.f32 1.5, %v980
        %v982 = vmul.f32 %v977, %v981
        %vm983 = vweird.f32 %v948
        %vm984 = vweird.f32 %v977
        %vm985 = vmor %vm983, %vm984
        %v986 = vsel %vm985, %v977, %v982
        %v987 = vrsqrt.pop %v949
        %v988 = vmul.f32 %v987, %v949
        %v989 = vmul.f32 %v988, %v987
        %v990 = vmul.f32 0.5, %v989
        %v991 = vsub.f32 1.5, %v990
        %v992 = vmul.f32 %v987, %v991
        %vm993 = vweird.f32 %v949
        %vm994 = vweird.f32 %v987
        %vm995 = vmor %vm993, %vm994
        %v996 = vsel %vm995, %v987, %v992
        %v997 = vrsqrt.pop %v950
        %v998 = vmul.f32 %v997, %v950
        %v999 = vmul.f32 %v998, %v997
        %v1000 = vmul.f32 0.5, %v999
        %v1001 = vsub.f32 1.5, %v1000
        %v1002 = vmul.f32 %v997, %v1001
        %vm1003 = vweird.f32 %v950
        %vm1004 = vweird.f32 %v997
        %vm1005 = vmor %vm1003, %vm1004
        %v1006 = vsel %vm1005, %v997, %v1002
        %v1007 = vrsqrt.pop %v951
        %v1008 = vmul.f32 %v1007, %v951
        %v1009 = vmul.f32 %v1008, %v1007
        %v1010 = vmul.f32 0.5, %v1009
        %v1011 = vsub.f32 1.5, %v1010
        %v1012 = vmul.f32 %v1007, %v1011
        %vm1013 = vweird.f32 %v951
        %vm1014 = vweird.f32 %v1007
        %vm1015 = vmor %vm1013, %vm1014
        %v1016 = vsel %vm1015, %v1007, %v1012
        %v1017 = vrsqrt.pop %v962
        %v1018 = vmul.f32 %v1017, %v962
        %v1019 = vmul.f32 %v1018, %v1017
        %v1020 = vmul.f32 0.5, %v1019
        %v1021 = vsub.f32 1.5, %v1020
        %v1022 = vmul.f32 %v1017, %v1021
        %vm1023 = vweird.f32 %v962
        %vm1024 = vweird.f32 %v1017
        %vm1025 = vmor %vm1023, %vm1024
        %v1026 = vsel %vm1025, %v1017, %v1022
        %v1027 = vrsqrt.pop %v963
        %v1028 = vmul.f32 %v1027, %v963
        %v1029 = vmul.f32 %v1028, %v1027
        %v1030 = vmul.f32 0.5, %v1029
        %v1031 = vsub.f32 1.5, %v1030
        %v1032 = vmul.f32 %v1027, %v1031
        %vm1033 = vweird.f32 %v963
        %vm1034 = vweird.f32 %v1027
        %vm1035 = vmor %vm1033, %vm1034
        %v1036 = vsel %vm1035, %v1027, %v1032
        %v1037 = vrsqrt.pop %v964
        %v1038 = vmul.f32 %v1037, %v964
        %v1039 = vmul.f32 %v1038, %v1037
        %v1040 = vmul.f32 0.5, %v1039
        %v1041 = vsub.f32 1.5, %v1040
        %v1042 = vmul.f32 %v1037, %v1041
        %vm1043 = vweird.f32 %v964
        %vm1044 = vweird.f32 %v1037
        %vm1045 = vmor %vm1043, %vm1044
        %v1046 = vsel %vm1045, %v1037, %v1042
        %v1047 = vrsqrt.pop %v965
        %v1048 = vmul.f32 %v1047, %v965
        %v1049 = vmul.f32 %v1048, %v1047
        %v1050 = vmul.f32 0.5, %v1049
        %v1051 = vsub.f32 1.5, %v1050
        %v1052 = vmul.f32 %v1047, %v1051
        %vm1053 = vweird.f32 %v965
        %vm1054 = vweird.f32 %v1047
        %vm1055 = vmor %vm1053, %vm1054
        %v1056 = vsel %vm1055, %v1047, %v1052
        %v1057 = vrsqrt.pop %v966
        %v1058 = vmul.f32 %v1057, %v966
        %v1059 = vmul.f32 %v1058, %v1057
        %v1060 = vmul.f32 0.5, %v1059
        %v1061 = vsub.f32 1.5, %v1060
        %v1062 = vmul.f32 %v1057, %v1061
        %vm1063 = vweird.f32 %v966
        %vm1064 = vweird.f32 %v1057
        %vm1065 = vmor %vm1063, %vm1064
        %v1066 = vsel %vm1065, %v1057, %v1062
        %v1067 = vmul.f32 %v947, %v976
        %v1068 = vmul.f32 %v948, %v986
        %v1069 = vmul.f32 %v949, %v996
        %v1070 = vmul.f32 %v950, %v1006
        %v1071 = vmul.f32 %v951, %v1016
        %v1072 = vmul.f32 %v962, %v1026
        %v1073 = vmul.f32 %v963, %v1036
        %v1074 = vmul.f32 %v964, %v1046
        %v1075 = vmul.f32 %v965, %v1056
        %v1076 = vmul.f32 %v966, %v1066
        %v1077 = vsub.f32 %v1067, %v1072
        %v1078 = vsub.f32 %v1068, %v1073
        %v1079 = vsub.f32 %v1069, %v1074
        %v1080 = vsub.f32 %v1070, %v1075
        %v1081 = vsub.f32 %v1071, %v1076
        %v1082 = vand.u32 2147483647, %v1077
        %v1083 = vand.u32 2147483647, %v1078
        %v1084 = vand.u32 2147483647, %v1079
        %v1085 = vand.u32 2147483647, %v1080
        %v1086 = vand.u32 2147483647, %v1081
        %v1087 = vmul.f32 %v917, %v976
        %v1088 = vmul.f32 %v918, %v986
        %v1089 = vmul.f32 %v919, %v996
        %v1090 = vmul.f32 %v920, %v1006
        %v1091 = vmul.f32 %v921, %v1016
        %v1092 = vmul.f32 %v927, %v1026
        %v1093 = vmul.f32 %v928, %v1036
        %v1094 = vmul.f32 %v929, %v1046
        %v1095 = vmul.f32 %v930, %v1056
        %v1096 = vmul.f32 %v931, %v1066
        %v1097 = vsub.f32 %v1087, %v1092
        %v1098 = vsub.f32 %v1088, %v1093
        %v1099 = vsub.f32 %v1089, %v1094
        %v1100 = vsub.f32 %v1090, %v1095
        %v1101 = vsub.f32 %v1091, %v1096
        %v1102 = vmul.f32 %v922, %v976
        %v1103 = vmul.f32 %v923, %v986
        %v1104 = vmul.f32 %v924, %v996
        %v1105 = vmul.f32 %v925, %v1006
        %v1106 = vmul.f32 %v926, %v1016
        %v1107 = vmul.f32 %v932, %v1026
        %v1108 = vmul.f32 %v933, %v1036
        %v1109 = vmul.f32 %v934, %v1046
        %v1110 = vmul.f32 %v935, %v1056
        %v1111 = vmul.f32 %v936, %v1066
        %v1112 = vsub.f32 %v1102, %v1107
        %v1113 = vsub.f32 %v1103, %v1108
        %v1114 = vsub.f32 %v1104, %v1109
        %v1115 = vsub.f32 %v1105, %v1110
        %v1116 = vsub.f32 %v1106, %v1111
        %v1117 = vmul.f32 %v1097, %v1097
        %v1118 = vmul.f32 %v1098, %v1098
        %v1119 = vmul.f32 %v1099, %v1099
        %v1120 = vmul.f32 %v1100, %v1100
        %v1121 = vmul.f32 %v1101, %v1101
        %v1122 = vmul.f32 %v1112, %v1112
        %v1123 = vmul.f32 %v1113, %v1113
        %v1124 = vmul.f32 %v1114, %v1114
        %v1125 = vmul.f32 %v1115, %v1115
        %v1126 = vmul.f32 %v1116, %v1116
        %v1127 = vadd.f32 %v1117, %v1122
        %v1128 = vadd.f32 %v1118, %v1123
        %v1129 = vadd.f32 %v1119, %v1124
        %v1130 = vadd.f32 %v1120, %v1125
        %v1131 = vadd.f32 %v1121, %v1126
        %v1132 = vrsqrt.pop %v1127
        %v1133 = vmul.f32 %v1132, %v1127
        %v1134 = vmul.f32 %v1133, %v1132
        %v1135 = vmul.f32 0.5, %v1134
        %v1136 = vsub.f32 1.5, %v1135
        %v1137 = vmul.f32 %v1132, %v1136
        %v1138 = vmul.f32 %v1127, %v1137
        %vm1139 = vcmp.eq.f32.partialorder %v1127, inf
        %v1140 = vsel %vm1139, %v1127, %v1138
        %vm1141 = vcmp.eq.f32.partialorder %v1127, 0.0
        %v1142 = vand.u32 %v1127, 2147483648
        %v1143 = vsel %vm1141, %v1142, %v1140
        %v1144 = vrsqrt.pop %v1128
        %v1145 = vmul.f32 %v1144, %v1128
        %v1146 = vmul.f32 %v1145, %v1144
        %v1147 = vmul.f32 0.5, %v1146
        %v1148 = vsub.f32 1.5, %v1147
        %v1149 = vmul.f32 %v1144, %v1148
        %v1150 = vmul.f32 %v1128, %v1149
        %vm1151 = vcmp.eq.f32.partialorder %v1128, inf
        %v1152 = vsel %vm1151, %v1128, %v1150
        %vm1153 = vcmp.eq.f32.partialorder %v1128, 0.0
        %v1154 = vand.u32 %v1128, 2147483648
        %v1155 = vsel %vm1153, %v1154, %v1152
        %v1156 = vrsqrt.pop %v1129
        %v1157 = vmul.f32 %v1156, %v1129
        %v1158 = vmul.f32 %v1157, %v1156
        %v1159 = vmul.f32 0.5, %v1158
        %v1160 = vsub.f32 1.5, %v1159
        %v1161 = vmul.f32 %v1156, %v1160
        %v1162 = vmul.f32 %v1129, %v1161
        %vm1163 = vcmp.eq.f32.partialorder %v1129, inf
        %v1164 = vsel %vm1163, %v1129, %v1162
        %vm1165 = vcmp.eq.f32.partialorder %v1129, 0.0
        %v1166 = vand.u32 %v1129, 2147483648
        %v1167 = vsel %vm1165, %v1166, %v1164
        %v1168 = vrsqrt.pop %v1130
        %v1169 = vmul.f32 %v1168, %v1130
        %v1170 = vmul.f32 %v1169, %v1168
        %v1171 = vmul.f32 0.5, %v1170
        %v1172 = vsub.f32 1.5, %v1171
        %v1173 = vmul.f32 %v1168, %v1172
        %v1174 = vmul.f32 %v1130, %v1173
        %vm1175 = vcmp.eq.f32.partialorder %v1130, inf
        %v1176 = vsel %vm1175, %v1130, %v1174
        %vm1177 = vcmp.eq.f32.partialorder %v1130, 0.0
        %v1178 = vand.u32 %v1130, 2147483648
        %v1179 = vsel %vm1177, %v1178, %v1176
        %v1180 = vrsqrt.pop %v1131
        %v1181 = vmul.f32 %v1180, %v1131
        %v1182 = vmul.f32 %v1181, %v1180
        %v1183 = vmul.f32 0.5, %v1182
        %v1184 = vsub.f32 1.5, %v1183
        %v1185 = vmul.f32 %v1180, %v1184
        %v1186 = vmul.f32 %v1131, %v1185
        %vm1187 = vcmp.eq.f32.partialorder %v1131, inf
        %v1188 = vsel %vm1187, %v1131, %v1186
        %vm1189 = vcmp.eq.f32.partialorder %v1131, 0.0
        %v1190 = vand.u32 %v1131, 2147483648
        %v1191 = vsel %vm1189, %v1190, %v1188
        %v1192 = vadd.f32 %v1082, %v1143
        %v1193 = vadd.f32 %v1083, %v1155
        %v1194 = vadd.f32 %v1084, %v1167
        %v1195 = vadd.f32 %v1085, %v1179
        %v1196 = vadd.f32 %v1086, %v1191
        %v1197 = vadd.f32 %v634, %v678
        %v1198 = vadd.f32 %v636, %v680
        %v1199 = vadd.f32 %v639, %v683
        %v1200 = vadd.f32 %v641, %v685
        %v1201 = vadd.f32 %v644, %v688
        %v1202 = vsub.f32 %v701, %v724
        %v1203 = vsub.f32 %v703, %v726
        %v1204 = vsub.f32 %v706, %v729
        %v1205 = vsub.f32 %v708, %v731
        %v1206 = vsub.f32 %v711, %v734
        %v1207 = vadd.f32 %v826, %v858
        %v1208 = vadd.f32 %v828, %v860
        %v1209 = vadd.f32 %v831, %v863
        %v1210 = vadd.f32 %v833, %v865
        %v1211 = vadd.f32 %v836, %v868
        %v1212 = vsub.f32 %v881, %v904
        %v1213 = vsub.f32 %v883, %v906
        %v1214 = vsub.f32 %v886, %v909
        %v1215 = vsub.f32 %v888, %v911
        %v1216 = vsub.f32 %v891, %v914
        %v1217 = vmul.f32 %v1197, %v1197
        %v1218 = vmul.f32 %v1198, %v1198
        %v1219 = vmul.f32 %v1199, %v1199
        %v1220 = vmul.f32 %v1200, %v1200
        %v1221 = vmul.f32 %v1201, %v1201
        %v1222 = vmul.f32 %v1202, %v1202
        %v1223 = vmul.f32 %v1203, %v1203
        %v1224 = vmul.f32 %v1204, %v1204
        %v1225 = vmul.f32 %v1205, %v1205
        %v1226 = vmul.f32 %v1206, %v1206
        %v1227 = vadd.f32 %v1217, %v1222
        %v1228 = vadd.f32 %v1218, %v1223
        %v1229 = vadd.f32 %v1219, %v1224
        %v1230 = vadd.f32 %v1220, %v1225
        %v1231 = vadd.f32 %v1221, %v1226
        %v1232 = vmul.f32 %v1207, %v1207
        %v1233 = vmul.f32 %v1208, %v1208
        %v1234 = vmul.f32 %v1209, %v1209
        %v1235 = vmul.f32 %v1210, %v1210
        %v1236 = vmul.f32 %v1211, %v1211
        %v1237 = vmul.f32 %v1212, %v1212
        %v1238 = vmul.f32 %v1213, %v1213
        %v1239 = vmul.f32 %v1214, %v1214
        %v1240 = vmul.f32 %v1215, %v1215
        %v1241 = vmul.f32 %v1216, %v1216
        %v1242 = vadd.f32 %v1232, %v1237
        %v1243 = vadd.f32 %v1233, %v1238
        %v1244 = vadd.f32 %v1234, %v1239
        %v1245 = vadd.f32 %v1235, %v1240
        %v1246 = vadd.f32 %v1236, %v1241
        %v1247 = vrsqrt.pop %v1227
        %v1248 = vmul.f32 %v1247, %v1227
        %v1249 = vmul.f32 %v1248, %v1247
        %v1250 = vmul.f32 0.5, %v1249
        %v1251 = vsub.f32 1.5, %v1250
        %v1252 = vmul.f32 %v1247, %v1251
        %vm1253 = vweird.f32 %v1227
        %vm1254 = vweird.f32 %v1247
        %vm1255 = vmor %vm1253, %vm1254
        %v1256 = vsel %vm1255, %v1247, %v1252
        %v1257 = vrsqrt.pop %v1228
        %v1258 = vmul.f32 %v1257, %v1228
        %v1259 = vmul.f32 %v1258, %v1257
        %v1260 = vmul.f32 0.5, %v1259
        %v1261 = vsub.f32 1.5, %v1260
        %v1262 = vmul.f32 %v1257, %v1261
        %vm1263 = vweird.f32 %v1228
        %vm1264 = vweird.f32 %v1257
        %vm1265 = vmor %vm1263, %vm1264
        %v1266 = vsel %vm1265, %v1257, %v1262
        %v1267 = vrsqrt.pop %v1229
        %v1268 = vmul.f32 %v1267, %v1229
        %v1269 = vmul.f32 %v1268, %v1267
        %v1270 = vmul.f32 0.5, %v1269
        %v1271 = vsub.f32 1.5, %v1270
        %v1272 = vmul.f32 %v1267, %v1271
        %vm1273 = vweird.f32 %v1229
        %vm1274 = vweird.f32 %v1267
        %vm1275 = vmor %vm1273, %vm1274
        %v1276 = vsel %vm1275, %v1267, %v1272
        %v1277 = vrsqrt.pop %v1230
        %v1278 = vmul.f32 %v1277, %v1230
        %v1279 = vmul.f32 %v1278, %v1277
        %v1280 = vmul.f32 0.5, %v1279
        %v1281 = vsub.f32 1.5, %v1280
        %v1282 = vmul.f32 %v1277, %v1281
        %vm1283 = vweird.f32 %v1230
        %vm1284 = vweird.f32 %v1277
        %vm1285 = vmor %vm1283, %vm1284
        %v1286 = vsel %vm1285, %v1277, %v1282
        %v1287 = vrsqrt.pop %v1231
        %v1288 = vmul.f32 %v1287, %v1231
        %v1289 = vmul.f32 %v1288, %v1287
        %v1290 = vmul.f32 0.5, %v1289
        %v1291 = vsub.f32 1.5, %v1290
        %v1292 = vmul.f32 %v1287, %v1291
        %vm1293 = vweird.f32 %v1231
        %vm1294 = vweird.f32 %v1287
        %vm1295 = vmor %vm1293, %vm1294
        %v1296 = vsel %vm1295, %v1287, %v1292
        %v1297 = vrsqrt.pop %v1242
        %v1298 = vmul.f32 %v1297, %v1242
        %v1299 = vmul.f32 %v1298, %v1297
        %v1300 = vmul.f32 0.5, %v1299
        %v1301 = vsub.f32 1.5, %v1300
        %v1302 = vmul.f32 %v1297, %v1301
        %vm1303 = vweird.f32 %v1242
        %vm1304 = vweird.f32 %v1297
        %vm1305 = vmor %vm1303, %vm1304
        %v1306 = vsel %vm1305, %v1297, %v1302
        %v1307 = vrsqrt.pop %v1243
        %v1308 = vmul.f32 %v1307, %v1243
        %v1309 = vmul.f32 %v1308, %v1307
        %v1310 = vmul.f32 0.5, %v1309
        %v1311 = vsub.f32 1.5, %v1310
        %v1312 = vmul.f32 %v1307, %v1311
        %vm1313 = vweird.f32 %v1243
        %vm1314 = vweird.f32 %v1307
        %vm1315 = vmor %vm1313, %vm1314
        %v1316 = vsel %vm1315, %v1307, %v1312
        %v1317 = vrsqrt.pop %v1244
        %v1318 = vmul.f32 %v1317, %v1244
        %v1319 = vmul.f32 %v1318, %v1317
        %v1320 = vmul.f32 0.5, %v1319
        %v1321 = vsub.f32 1.5, %v1320
        %v1322 = vmul.f32 %v1317, %v1321
        %vm1323 = vweird.f32 %v1244
        %vm1324 = vweird.f32 %v1317
        %vm1325 = vmor %vm1323, %vm1324
        %v1326 = vsel %vm1325, %v1317, %v1322
        %v1327 = vrsqrt.pop %v1245
        %v1328 = vmul.f32 %v1327, %v1245
        %v1329 = vmul.f32 %v1328, %v1327
        %v1330 = vmul.f32 0.5, %v1329
        %v1331 = vsub.f32 1.5, %v1330
        %v1332 = vmul.f32 %v1327, %v1331
        %vm1333 = vweird.f32 %v1245
        %vm1334 = vweird.f32 %v1327
        %vm1335 = vmor %vm1333, %vm1334
        %v1336 = vsel %vm1335, %v1327, %v1332
        %v1337 = vrsqrt.pop %v1246
        %v1338 = vmul.f32 %v1337, %v1246
        %v1339 = vmul.f32 %v1338, %v1337
        %v1340 = vmul.f32 0.5, %v1339
        %v1341 = vsub.f32 1.5, %v1340
        %v1342 = vmul.f32 %v1337, %v1341
        %vm1343 = vweird.f32 %v1246
        %vm1344 = vweird.f32 %v1337
        %vm1345 = vmor %vm1343, %vm1344
        %v1346 = vsel %vm1345, %v1337, %v1342
        %v1347 = vmul.f32 %v1227, %v1256
        %v1348 = vmul.f32 %v1228, %v1266
        %v1349 = vmul.f32 %v1229, %v1276
        %v1350 = vmul.f32 %v1230, %v1286
        %v1351 = vmul.f32 %v1231, %v1296
        %v1352 = vmul.f32 %v1242, %v1306
        %v1353 = vmul.f32 %v1243, %v1316
        %v1354 = vmul.f32 %v1244, %v1326
        %v1355 = vmul.f32 %v1245, %v1336
        %v1356 = vmul.f32 %v1246, %v1346
        %v1357 = vsub.f32 %v1347, %v1352
        %v1358 = vsub.f32 %v1348, %v1353
        %v1359 = vsub.f32 %v1349, %v1354
        %v1360 = vsub.f32 %v1350, %v1355
        %v1361 = vsub.f32 %v1351, %v1356
        %v1362 = vand.u32 2147483647, %v1357
        %v1363 = vand.u32 2147483647, %v1358
        %v1364 = vand.u32 2147483647, %v1359
        %v1365 = vand.u32 2147483647, %v1360
        %v1366 = vand.u32 2147483647, %v1361
        %v1367 = vmul.f32 %v1197, %v1256
        %v1368 = vmul.f32 %v1198, %v1266
        %v1369 = vmul.f32 %v1199, %v1276
        %v1370 = vmul.f32 %v1200, %v1286
        %v1371 = vmul.f32 %v1201, %v1296
        %v1372 = vmul.f32 %v1207, %v1306
        %v1373 = vmul.f32 %v1208, %v1316
        %v1374 = vmul.f32 %v1209, %v1326
        %v1375 = vmul.f32 %v1210, %v1336
        %v1376 = vmul.f32 %v1211, %v1346
        %v1377 = vsub.f32 %v1367, %v1372
        %v1378 = vsub.f32 %v1368, %v1373
        %v1379 = vsub.f32 %v1369, %v1374
        %v1380 = vsub.f32 %v1370, %v1375
        %v1381 = vsub.f32 %v1371, %v1376
        %v1382 = vmul.f32 %v1202, %v1256
        %v1383 = vmul.f32 %v1203, %v1266
        %v1384 = vmul.f32 %v1204, %v1276
        %v1385 = vmul.f32 %v1205, %v1286
        %v1386 = vmul.f32 %v1206, %v1296
        %v1387 = vmul.f32 %v1212, %v1306
        %v1388 = vmul.f32 %v1213, %v1316
        %v1389 = vmul.f32 %v1214, %v1326
        %v1390 = vmul.f32 %v1215, %v1336
        %v1391 = vmul.f32 %v1216, %v1346
        %v1392 = vsub.f32 %v1382, %v1387
        %v1393 = vsub.f32 %v1383, %v1388
        %v1394 = vsub.f32 %v1384, %v1389
        %v1395 = vsub.f32 %v1385, %v1390
        %v1396 = vsub.f32 %v1386, %v1391
        %v1397 = vmul.f32 %v1377, %v1377
        %v1398 = vmul.f32 %v1378, %v1378
        %v1399 = vmul.f32 %v1379, %v1379
        %v1400 = vmul.f32 %v1380, %v1380
        %v1401 = vmul.f32 %v1381, %v1381
        %v1402 = vmul.f32 %v1392, %v1392
        %v1403 = vmul.f32 %v1393, %v1393
        %v1404 = vmul.f32 %v1394, %v1394
        %v1405 = vmul.f32 %v1395, %v1395
        %v1406 = vmul.f32 %v1396, %v1396
        %v1407 = vadd.f32 %v1397, %v1402
        %v1408 = vadd.f32 %v1398, %v1403
        %v1409 = vadd.f32 %v1399, %v1404
        %v1410 = vadd.f32 %v1400, %v1405
        %v1411 = vadd.f32 %v1401, %v1406
        %v1412 = vrsqrt.pop %v1407
        %v1413 = vmul.f32 %v1412, %v1407
        %v1414 = vmul.f32 %v1413, %v1412
        %v1415 = vmul.f32 0.5, %v1414
        %v1416 = vsub.f32 1.5, %v1415
        %v1417 = vmul.f32 %v1412, %v1416
        %v1418 = vmul.f32 %v1407, %v1417
        %vm1419 = vcmp.eq.f32.partialorder %v1407, inf
        %v1420 = vsel %vm1419, %v1407, %v1418
        %vm1421 = vcmp.eq.f32.partialorder %v1407, 0.0
        %v1422 = vand.u32 %v1407, 2147483648
        %v1423 = vsel %vm1421, %v1422, %v1420
        %v1424 = vrsqrt.pop %v1408
        %v1425 = vmul.f32 %v1424, %v1408
        %v1426 = vmul.f32 %v1425, %v1424
        %v1427 = vmul.f32 0.5, %v1426
        %v1428 = vsub.f32 1.5, %v1427
        %v1429 = vmul.f32 %v1424, %v1428
        %v1430 = vmul.f32 %v1408, %v1429
        %vm1431 = vcmp.eq.f32.partialorder %v1408, inf
        %v1432 = vsel %vm1431, %v1408, %v1430
        %vm1433 = vcmp.eq.f32.partialorder %v1408, 0.0
        %v1434 = vand.u32 %v1408, 2147483648
        %v1435 = vsel %vm1433, %v1434, %v1432
        %v1436 = vrsqrt.pop %v1409
        %v1437 = vmul.f32 %v1436, %v1409
        %v1438 = vmul.f32 %v1437, %v1436
        %v1439 = vmul.f32 0.5, %v1438
        %v1440 = vsub.f32 1.5, %v1439
        %v1441 = vmul.f32 %v1436, %v1440
        %v1442 = vmul.f32 %v1409, %v1441
        %vm1443 = vcmp.eq.f32.partialorder %v1409, inf
        %v1444 = vsel %vm1443, %v1409, %v1442
        %vm1445 = vcmp.eq.f32.partialorder %v1409, 0.0
        %v1446 = vand.u32 %v1409, 2147483648
        %v1447 = vsel %vm1445, %v1446, %v1444
        %v1448 = vrsqrt.pop %v1410
        %v1449 = vmul.f32 %v1448, %v1410
        %v1450 = vmul.f32 %v1449, %v1448
        %v1451 = vmul.f32 0.5, %v1450
        %v1452 = vsub.f32 1.5, %v1451
        %v1453 = vmul.f32 %v1448, %v1452
        %v1454 = vmul.f32 %v1410, %v1453
        %vm1455 = vcmp.eq.f32.partialorder %v1410, inf
        %v1456 = vsel %vm1455, %v1410, %v1454
        %vm1457 = vcmp.eq.f32.partialorder %v1410, 0.0
        %v1458 = vand.u32 %v1410, 2147483648
        %v1459 = vsel %vm1457, %v1458, %v1456
        %v1460 = vrsqrt.pop %v1411
        %v1461 = vmul.f32 %v1460, %v1411
        %v1462 = vmul.f32 %v1461, %v1460
        %v1463 = vmul.f32 0.5, %v1462
        %v1464 = vsub.f32 1.5, %v1463
        %v1465 = vmul.f32 %v1460, %v1464
        %v1466 = vmul.f32 %v1411, %v1465
        %vm1467 = vcmp.eq.f32.partialorder %v1411, inf
        %v1468 = vsel %vm1467, %v1411, %v1466
        %vm1469 = vcmp.eq.f32.partialorder %v1411, 0.0
        %v1470 = vand.u32 %v1411, 2147483648
        %v1471 = vsel %vm1469, %v1470, %v1468
        %v1472 = vadd.f32 %v1362, %v1423
        %v1473 = vadd.f32 %v1363, %v1435
        %v1474 = vadd.f32 %v1364, %v1447
        %v1475 = vadd.f32 %v1365, %v1459
        %v1476 = vadd.f32 %v1366, %v1471
        %v1477 = vld [vmem:[#allocation2] sm:$0xff]
        %v1478 = vld [vmem:[#allocation2 + $0x8] sm:$0xff]
        %v1479 = vld [vmem:[#allocation2 + $0x10] sm:$0xff]
        %v1480 = vld [vmem:[#allocation2 + $0x18] sm:$0xff]
        %v1481 = vld [vmem:[#allocation2 + $0x20] sm:$0xf]
        %1483 = vset.pattern.permute.xlu0 0
        %1484 = vperm.xlu0 %1483, %v439
        %v1485 = vpop.permute.xlu0 %1484
        %1488 = vset.pattern.permute.xlu0 0
        %1489 = vperm.xlu0 %1488, %v440
        %v1490 = vpop.permute.xlu0 %1489
        %1493 = vset.pattern.permute.xlu0 0
        %1494 = vperm.xlu0 %1493, %v441
        %v1495 = vpop.permute.xlu0 %1494
        %1498 = vset.pattern.permute.xlu0 0
        %1499 = vperm.xlu0 %1498, %v442
        %v1500 = vpop.permute.xlu0 %1499
        %1503 = vset.pattern.permute.xlu0 0
        %1504 = vperm.xlu0 %1503, %v443
        %v1505 = vpop.permute.xlu0 %1504
        %v1507 = vmul.f32 %v1485, %v1472
        %v1508 = vmul.f32 %v1490, %v1473
        %v1509 = vmul.f32 %v1495, %v1474
        %v1510 = vmul.f32 %v1500, %v1475
        %v1511 = vmul.f32 %v1505, %v1476
        %v1512 = vadd.f32 %v1192, %v1507
        %v1513 = vadd.f32 %v1193, %v1508
        %v1514 = vadd.f32 %v1194, %v1509
        %v1515 = vadd.f32 %v1195, %v1510
        %v1516 = vadd.f32 %v1196, %v1511
        %v1517 = vadd.f32 %v1477, %v1512
        %v1518 = vadd.f32 %v1478, %v1513
        %v1519 = vadd.f32 %v1479, %v1514
        %v1520 = vadd.f32 %v1480, %v1515
        %v1521 = vadd.f32 %v1481, %v1516
        %vm1522 = vcmask 138240
        %1523 = vst.msk [vmem:[#allocation2] sm:$0xff] %vm1522, %v1517
        %1524 = vst.msk [vmem:[#allocation2 + $0x8] sm:$0xff] %vm1522, %v1518
        %1525 = vst.msk [vmem:[#allocation2 + $0x10] sm:$0xff] %vm1522, %v1519
        %1526 = vst.msk [vmem:[#allocation2 + $0x18] sm:$0xff] %vm1522, %v1520
        %vm1527 = vcmask 134144
        %1528 = vst.msk [vmem:[#allocation2 + $0x20] sm:$0xf] %vm1527, %v1521
        // Predicated region
        $region135: #{tpu_custom_call.1} parent=121 // pred_check
          %p1529 = pneg %p412
        $region136: #{tpu_custom_call.1} parent=121 // pred_check_branch
          %1531 = sbr.rel (%p1529) target = $region138
        $region137: #{tpu_custom_call.1} parent=121 // pred_region
          %v1532 = vld [vmem:[#allocation2] sm:$0xff]
          %v1533 = vld [vmem:[#allocation2 + $0x8] sm:$0xff]
          %v1534 = vld [vmem:[#allocation2 + $0x10] sm:$0xff]
          %v1535 = vld [vmem:[#allocation2 + $0x18] sm:$0xff]
          %v1536 = vld [vmem:[#allocation2 + $0x20] sm:$0xf]
          %v1537 = vsel %vm1522, %v1532, 0.0
          %v1538 = vsel %vm1522, %v1533, 0.0
          %v1539 = vadd.f32 %v1537, %v1538
          %v1540 = vsel %vm1522, %v1534, 0.0
          %v1541 = vadd.f32 %v1539, %v1540
          %v1542 = vsel %vm1522, %v1535, 0.0
          %v1543 = vadd.f32 %v1541, %v1542
          %v1544 = vsel %vm1527, %v1536, 0.0
          %v1545 = vadd.f32 %v1543, %v1544
          %1546 = vadd.xlane.f32.xlu0 %v1545
          %v1547 = vpop.xlane.xlu0 %1546
          %v1548 = vrot.slane %v1547, 4
          %v1549 = vadd.f32 %v1547, %v1548
          %v1550 = vrot.slane %v1549, 2
          %v1551 = vadd.f32 %v1549, %v1550
          %v1552 = vrot.slane %v1551, 1
          %v1553 = vadd.f32 %v1551, %v1552
          %s1554 = vtos %v1553
          %v1555 = vstv %s1554
          %v1556 = vmul.f32 %v1555, 0.00045955883
          %1557 = vst [vmem:[%s408] sm:$0xff] %v1556
        $region138: #{tpu_custom_call.1} parent=121 // pred_fallthru
          _
        %s1558 = sand.u32 %s202, 1
        %s1559 = scalar_lea.sflag [#allocation6], %s1558
        %s1560 = sand.u32 %s202, 1
        %s1561 = smul.addr %s1560, 8
        %s1562 = scalar_lea.vmem [#allocation5], %s1561
        // Predicated region
        $region139: #{tpu_custom_call.1} parent=121 // pred_check
          %p1563 = pneg %p212
        $region140: #{tpu_custom_call.1} parent=121 // pred_check_branch
          %1565 = sbr.rel (%p1563) target = $region142
        $region141: #{tpu_custom_call.1} parent=121 // pred_region
          %1567 = vsyncadd %s1559, 0
          %s1568 = smul.addr %s25, 8
          %s1569 = scalar_lea.hbm %s7, %s1568
          %s1571 = sshll.u32 %s1562, 4
          %s1572 = int_to_ptr.vmem [resolvable:$true] %s1571
          %s1573 = sshll.u32 %s1569, 4
          %s1574 = int_to_ptr.hbm [resolvable:$true] %s1573
          %1576 = dma.vmem_to_hbm [thread:$0]  %s1572, 128, %s1574, %s1559
        $region142: #{tpu_custom_call.1} parent=121 // pred_fallthru
          _
      $region122: #{tpu_custom_call.1} parent=5 // pred_fallthru
        _
      %p1577 = scmp.le.s32.totalorder 2, %s16
      // Predicated region
      $region143: #{tpu_custom_call.1} parent=5 // pred_check
        %p1578 = pneg %p1577
      $region144: #{tpu_custom_call.1} parent=5 // pred_check_branch
        %1580 = sbr.rel (%p1578) target = $region146
      $region145: #{tpu_custom_call.1} parent=5 // pred_region
        %s1581 = ssub.s32 %s16, 2
        // Predicated region
        $region147: #{tpu_custom_call.1} parent=145 // pred_check
          %p1582 = pneg %p218
        $region148: #{tpu_custom_call.1} parent=145 // pred_check_branch
          %1584 = sbr.rel (%p1582) target = $region150
        $region149: #{tpu_custom_call.1} parent=145 // pred_region
          %s1585 = sand.u32 %s203, 1
          %s1586 = scalar_lea.sflag [#allocation6], %s1585
          %s1587 = sand.u32 %s203, 1
          %s1588 = smul.addr %s1587, 8
          %s1589 = scalar_lea.vmem [#allocation5], %s1588
          %1591 = dma.done %s1586, 128
        $region150: #{tpu_custom_call.1} parent=145 // pred_fallthru
          _
      $region146: #{tpu_custom_call.1} parent=5 // pred_fallthru
        _
    $region6: #{tpu_custom_call.1} parent=1 // loop_footer
      %s20 = sadd.s32 1, %s16
    $region7: #{tpu_custom_call.1} parent=1 // loop_footer_branch
      %15 = sbr.rel target = $region3
    $region8: #{tpu_custom_call.1} parent=1 // loop_exit
      _
    %1592 = vsyncpa [#allocation6], 1
    %s1593 = scalar_lea.sflag [#allocation6], 1
    %1594 = vsyncpa %s1593, 1

</llo_original>
